<compile_context>
chip_gen: v7x
topology: tpu7x:2x2x1
jax: 0.10.0
libtpu: 0.0.40
codegen_flags: <defaults>
</compile_context>

<pallas_src>
import jax
import jax.numpy as jnp
import numpy as np
from jax.experimental import pallas as pl
from jax.experimental.pallas import tpu as pltpu

PI = 3.141592653589793


def _round_up(a, m):
    return ((a + m - 1) // m) * m


# ----------------------------- Pallas kernel ------------------------------ #
def _make_critic_kernel(num_layers, Dp, L):
    """Fused two-head critic in transposed (feature-major) layout."""

    def kernel(xu_ref, *refs):
        q_ref = refs[-1]          # (2, TB) f32 output: row 0 = q1, row 1 = q2
        w = refs[:-1]             # packed fused weights / biases

        xu = xu_ref[...]          # (Dp, TB) f32, batch on lanes

        # Positional embedding on VPU/EUP, exact f32 phases (MXU-free).
        # emb row ordering: row = t*Dp + d, t in [0, 2L):
        #   t <  L  -> sin(x_d * 2^t * pi)
        #   t >= L  -> cos(x_d * 2^(t-L) * pi)
        scaled = [xu * (float(2.0 ** l) * PI) for l in range(L)]
        parts = [jnp.sin(s) for s in scaled] + [jnp.cos(s) for s in scaled]
        emb = jnp.concatenate([p.astype(jnp.bfloat16) for p in parts], axis=0)

        # Layer 1: single K = 2*L*Dp matmul, both heads stacked along rows.
        h = jnp.dot(w[0][...], emb, preferred_element_type=jnp.float32) + w[1][...]
        h = jnp.maximum(h, 0.0)

        # Hidden layers: block-diagonal fused weights; final layer is the
        # head-packed (2, 2H) projection (no ReLU).
        idx = 2
        for layer in range(1, num_layers):
            h = jnp.dot(w[idx][...], h.astype(jnp.bfloat16),
                        preferred_element_type=jnp.float32) + w[idx + 1][...]
            idx += 2
            if layer < num_layers - 1:
                h = jnp.maximum(h, 0.0)

        q_ref[...] = h            # (2, TB) f32, lane-dense store

    return kernel


# ------------------------- host-side weight packing ------------------------ #
def pack_critic_params(params, D, Dp, L, hidden_dims):
    """Per-head (fan_in, fan_out) params -> fused transposed bf16 kernel params."""
    num_layers = len(hidden_dims) + 1
    H0 = hidden_dims[0]

    # Layer 1: original input column index is d*2L + t (per feature d:
    # [sin f0..fL-1, cos f0..fL-1]); kernel emb row index is t*Dp + d.
    # Permute rows, zero-pad features to Dp, transpose to (2H0, 2*L*Dp).
    w1 = jnp.concatenate([params["q1_w1"], params["q2_w1"]], axis=1)   # (D*2L, 2H0)
    w1 = w1.reshape(D, 2 * L, 2 * H0)
    w1 = jnp.pad(w1, ((0, Dp - D), (0, 0), (0, 0)))                    # (Dp, 2L, 2H0)
    w1 = jnp.transpose(w1, (1, 0, 2)).reshape(2 * L * Dp, 2 * H0)      # row t*Dp + d
    b1 = jnp.concatenate([params["q1_b1"], params["q2_b1"]], axis=1)   # (1, 2H0)

    packed = [w1.T.astype(jnp.bfloat16), b1.T.astype(jnp.float32)]

    # Hidden layers 2..n and the output layer: block-diagonal, transposed.
    for i in range(2, num_layers + 1):
        wa = params[f"q1_w{i}"].T                                      # (out, in)
        wb = params[f"q2_w{i}"].T
        w = jnp.concatenate(
            [jnp.concatenate([wa, jnp.zeros_like(wb)], axis=1),
             jnp.concatenate([jnp.zeros_like(wa), wb], axis=1)], axis=0)
        b = jnp.concatenate([params[f"q1_b{i}"], params[f"q2_b{i}"]], axis=1)
        packed.append(w.astype(jnp.bfloat16))
        packed.append(b.T.astype(jnp.float32))
    return packed


# ------------------------------ forward wrapper ---------------------------- #
def critic_forward(obs, action, params, hidden_dims, L, *, max_block_b=1024):
    """Returns (q1, q2), each (B, 1) float32."""
    xu = jnp.concatenate([obs, action], axis=-1).astype(jnp.float32)   # (B, D)
    B, D = xu.shape
    num_layers = len(hidden_dims) + 1
    Dp = _round_up(D, 8)   # pad features so in-kernel sublane blocks are tile-aligned

    packed = pack_critic_params(params, D, Dp, L, hidden_dims)

    # Batch (lane) tiling.  Per-step VMEM is tiny, so use large lane tiles to
    # amortize the ~0.35 us per-grid-step overhead, but keep >=2 grid steps for
    # large batches so v7x's two TensorCores both get work.
    Bp = _round_up(max(B, 128), 128)
    if Bp <= 256:
        TB = Bp
    else:
        TB = min(max_block_b, _round_up((Bp + 1) // 2, 256))
        Bp = _round_up(Bp, TB)

    # Transposed input: (Dp, Bp); zero padding rows/cols are inert.
    xu_t = jnp.pad(xu.T, ((0, Dp - D), (0, Bp - B)))

    kernel = _make_critic_kernel(num_layers, Dp, L)

    x_spec = pl.BlockSpec((Dp, TB), lambda i: (0, i))
    w_specs = [pl.BlockSpec(a.shape, lambda i: (0, 0)) for a in packed]
    out_spec = pl.BlockSpec((2, TB), lambda i: (0, i))

    q = pl.pallas_call(
        kernel,
        out_shape=jax.ShapeDtypeStruct((2, Bp), jnp.float32),
        grid_spec=pltpu.PrefetchScalarGridSpec(
            num_scalar_prefetch=0,
            grid=(Bp // TB,),
            in_specs=[x_spec] + w_specs,
            out_specs=out_spec,
        ),
        compiler_params=pltpu.CompilerParams(
            dimension_semantics=("parallel",)),
    )(xu_t, *packed)

    q1 = q[0, :B][:, None]
    q2 = q[1, :B][:, None]
    return q1, q2


# ----------------------- params init + plain-JAX reference ----------------- #
def init_linear(key, fan_in, fan_out):
    """PyTorch nn.Linear default init: U(-1/sqrt(fan_in), 1/sqrt(fan_in))."""
    kw, kb = jax.random.split(key)
    bound = 1.0 / np.sqrt(fan_in)
    w = jax.random.uniform(kw, (fan_in, fan_out), jnp.float32, -bound, bound)
    b = jax.random.uniform(kb, (1, fan_out), jnp.float32, -bound, bound)
    return w, b


def init_critic_params(key, input_dim, hidden_dims):
    dims = [input_dim] + list(hidden_dims) + [1]
    params = {}
    keys = jax.random.split(key, 2 * (len(dims) - 1))
    k = 0
    for head in ("q1", "q2"):
        for li, (din, dout) in enumerate(zip(dims[:-1], dims[1:]), start=1):
            w, b = init_linear(keys[k], din, dout)
            params[f"{head}_w{li}"] = w
            params[f"{head}_b{li}"] = b
            k += 1
    return params


def positional_embedding_ref(x, L):
    """Exactly mirrors PositionalEmbedding.forward (cat-then-view ordering)."""
    freq = 2.0 ** jnp.linspace(0.0, L - 1, L)
    xs = x[..., None] * freq * PI                                  # (B, D, L)
    emb = jnp.concatenate([jnp.sin(xs), jnp.cos(xs)], axis=-1)     # (B, D, 2L)
    return emb.reshape(x.shape[0], -1)                             # (B, D*2L)


def reference_forward(obs, action, params, hidden_dims, L):
    """Plain-JAX f32 reference of Critic.forward (PyTorch-faithful)."""
    xu = jnp.concatenate([obs, action], axis=-1)
    x = positional_embedding_ref(xu, L)
    n = len(hidden_dims) + 1

    def mlp(head):
        h = x
        for i in range(1, n + 1):
            h = h @ params[f"{head}_w{i}"] + params[f"{head}_b{i}"]
            if i < n:
                h = jnp.maximum(h, 0.0)
        return h

    return mlp("q1"), mlp("q2")


# --------------------------------- main ------------------------------------ #
if __name__ == "__main__":
    obs_dim = 8
    action_dim = 4
    hidden_dims = (32, 32)
    L = 4  # embedding_dim

    key = jax.random.PRNGKey(0)
    k_obs, k_act, k_params = jax.random.split(key, 3)

    input_dim = (obs_dim + action_dim) * 2 * L
    params = init_critic_params(k_params, input_dim, hidden_dims)

    # --- small-batch check (single grid step) ---
    B = 8
    obs = jax.random.normal(k_obs, (B, obs_dim), jnp.float32)
    action = jax.random.normal(k_act, (B, action_dim), jnp.float32)

    q1, q2 = critic_forward(obs, action, params, hidden_dims, L)
    q1 = jax.block_until_ready(q1)
    q2 = jax.block_until_ready(q2)

    q1_ref, q2_ref = reference_forward(obs, action, params, hidden_dims, L)
    np.testing.assert_allclose(np.asarray(q1), np.asarray(q1_ref),
                               rtol=5e-2, atol=5e-2)
    np.testing.assert_allclose(np.asarray(q2), np.asarray(q2_ref),
                               rtol=5e-2, atol=5e-2)
    assert q1.shape == (B, 1) and q2.shape == (B, 1)

    # --- larger-batch check (multi-step grid / batch tiling path) ---
    B2 = 300
    k_obs2, k_act2 = jax.random.split(jax.random.PRNGKey(1))
    obs2 = jax.random.normal(k_obs2, (B2, obs_dim), jnp.float32)
    action2 = jax.random.normal(k_act2, (B2, action_dim), jnp.float32)

    p1, p2 = critic_forward(obs2, action2, params, hidden_dims, L)
    p1 = jax.block_until_ready(p1)
    p2 = jax.block_until_ready(p2)
    p1_ref, p2_ref = reference_forward(obs2, action2, params, hidden_dims, L)
    np.testing.assert_allclose(np.asarray(p1), np.asarray(p1_ref),
                               rtol=5e-2, atol=5e-2)
    np.testing.assert_allclose(np.asarray(p2), np.asarray(p2_ref),
                               rtol=5e-2, atol=5e-2)
    assert p1.shape == (B2, 1) and p2.shape == (B2, 1)

    print("KERNEL_OK")
</pallas_src>

<mosaic_0001>
module attributes {stable_mosaic.version = 11 : i64} {
  func.func @kernel(%arg0: i32, %arg1: memref<16x128xf32, #tpu.memory_space<vmem>>, %arg2: memref<64x128xbf16, #tpu.memory_space<vmem>>, %arg3: memref<64x1xf32, #tpu.memory_space<vmem>>, %arg4: memref<64x64xbf16, #tpu.memory_space<vmem>>, %arg5: memref<64x1xf32, #tpu.memory_space<vmem>>, %arg6: memref<2x64xbf16, #tpu.memory_space<vmem>>, %arg7: memref<2x1xf32, #tpu.memory_space<vmem>>, %arg8: memref<2x128xf32, #tpu.memory_space<vmem>>) attributes {dimension_semantics = [#tpu.dimension_semantics<parallel>], iteration_bounds = array<i64: 1>, scalar_prefetch = 0 : i64, scratch_operands = 0 : i64, tpu.core_type = #tpu.core_type<tc>, window_params = [{transform_indices = @transform_0, window_bounds = array<i64: 16, 128>}, {pipeline_mode = #tpu.pipeline_mode<synchronous>, transform_indices = @transform_1, window_bounds = array<i64: 64, 128>}, {pipeline_mode = #tpu.pipeline_mode<synchronous>, transform_indices = @transform_2, window_bounds = array<i64: 64, 1>}, {pipeline_mode = #tpu.pipeline_mode<synchronous>, transform_indices = @transform_3, window_bounds = array<i64: 64, 64>}, {pipeline_mode = #tpu.pipeline_mode<synchronous>, transform_indices = @transform_4, window_bounds = array<i64: 64, 1>}, {pipeline_mode = #tpu.pipeline_mode<synchronous>, transform_indices = @transform_5, window_bounds = array<i64: 2, 64>}, {pipeline_mode = #tpu.pipeline_mode<synchronous>, transform_indices = @transform_6, window_bounds = array<i64: 2, 1>}, {transform_indices = @transform_7, window_bounds = array<i64: 2, 128>}]} {
    %c0 = arith.constant 0 : index
    %c0_0 = arith.constant 0 : index
    %0 = vector.load %arg1[%c0, %c0_0] : memref<16x128xf32, #tpu.memory_space<vmem>>, vector<16x128xf32>
    %cst = arith.constant 3.14159274 : f32
    %1 = vector.broadcast %cst : f32 to vector<16x128xf32>
    %2 = arith.mulf %0, %1 : vector<16x128xf32>
    %cst_1 = arith.constant 6.28318548 : f32
    %3 = vector.broadcast %cst_1 : f32 to vector<16x128xf32>
    %4 = arith.mulf %0, %3 : vector<16x128xf32>
    %cst_2 = arith.constant 12.566371 : f32
    %5 = vector.broadcast %cst_2 : f32 to vector<16x128xf32>
    %6 = arith.mulf %0, %5 : vector<16x128xf32>
    %cst_3 = arith.constant 25.1327419 : f32
    %7 = vector.broadcast %cst_3 : f32 to vector<16x128xf32>
    %8 = arith.mulf %0, %7 : vector<16x128xf32>
    %9 = math.sin %2 : vector<16x128xf32>
    %10 = math.sin %4 : vector<16x128xf32>
    %11 = math.sin %6 : vector<16x128xf32>
    %12 = math.sin %8 : vector<16x128xf32>
    %13 = math.cos %2 : vector<16x128xf32>
    %14 = math.cos %4 : vector<16x128xf32>
    %15 = math.cos %6 : vector<16x128xf32>
    %16 = math.cos %8 : vector<16x128xf32>
    %17 = arith.truncf %9 : vector<16x128xf32> to vector<16x128xbf16>
    %18 = arith.truncf %10 : vector<16x128xf32> to vector<16x128xbf16>
    %19 = arith.truncf %11 : vector<16x128xf32> to vector<16x128xbf16>
    %20 = arith.truncf %12 : vector<16x128xf32> to vector<16x128xbf16>
    %21 = arith.truncf %13 : vector<16x128xf32> to vector<16x128xbf16>
    %22 = arith.truncf %14 : vector<16x128xf32> to vector<16x128xbf16>
    %23 = arith.truncf %15 : vector<16x128xf32> to vector<16x128xbf16>
    %24 = arith.truncf %16 : vector<16x128xf32> to vector<16x128xbf16>
    %25 = tpu.concatenate %17, %18, %19, %20, %21, %22, %23, %24 in 0 : vector<16x128xbf16>, vector<16x128xbf16>, vector<16x128xbf16>, vector<16x128xbf16>, vector<16x128xbf16>, vector<16x128xbf16>, vector<16x128xbf16>, vector<16x128xbf16> -> vector<128x128xbf16>
    %c0_4 = arith.constant 0 : index
    %c0_5 = arith.constant 0 : index
    %26 = vector.load %arg2[%c0_4, %c0_5] : memref<64x128xbf16, #tpu.memory_space<vmem>>, vector<64x128xbf16>
    %cst_6 = arith.constant dense<0.000000e+00> : vector<64x128xf32>
    %27 = tpu.matmul %26, %25, %cst_6 {dimension_numbers = #tpu.dot_dimension_numbers<[1], [0], [0], [1], [0, 0, 1, 1], [], []>} : vector<64x128xbf16>, vector<128x128xbf16>, vector<64x128xf32> -> vector<64x128xf32>
    %c0_7 = arith.constant 0 : index
    %c0_8 = arith.constant 0 : index
    %28 = vector.load %arg3[%c0_7, %c0_8] : memref<64x1xf32, #tpu.memory_space<vmem>>, vector<64x1xf32>
    %29 = vector.broadcast %28 : vector<64x1xf32> to vector<64x128xf32>
    %30 = arith.addf %27, %29 : vector<64x128xf32>
    %cst_9 = arith.constant 0.000000e+00 : f32
    %31 = vector.broadcast %cst_9 : f32 to vector<64x128xf32>
    %32 = arith.maximumf %30, %31 : vector<64x128xf32>
    %c0_10 = arith.constant 0 : index
    %c0_11 = arith.constant 0 : index
    %33 = vector.load %arg4[%c0_10, %c0_11] : memref<64x64xbf16, #tpu.memory_space<vmem>>, vector<64x64xbf16>
    %34 = arith.truncf %32 : vector<64x128xf32> to vector<64x128xbf16>
    %cst_12 = arith.constant dense<0.000000e+00> : vector<64x128xf32>
    %35 = tpu.matmul %33, %34, %cst_12 {dimension_numbers = #tpu.dot_dimension_numbers<[1], [0], [0], [1], [0, 0, 1, 1], [], []>} : vector<64x64xbf16>, vector<64x128xbf16>, vector<64x128xf32> -> vector<64x128xf32>
    %c0_13 = arith.constant 0 : index
    %c0_14 = arith.constant 0 : index
    %36 = vector.load %arg5[%c0_13, %c0_14] : memref<64x1xf32, #tpu.memory_space<vmem>>, vector<64x1xf32>
    %37 = vector.broadcast %36 : vector<64x1xf32> to vector<64x128xf32>
    %38 = arith.addf %35, %37 : vector<64x128xf32>
    %cst_15 = arith.constant 0.000000e+00 : f32
    %39 = vector.broadcast %cst_15 : f32 to vector<64x128xf32>
    %40 = arith.maximumf %38, %39 : vector<64x128xf32>
    %c0_16 = arith.constant 0 : index
    %c0_17 = arith.constant 0 : index
    %41 = vector.load %arg6[%c0_16, %c0_17] : memref<2x64xbf16, #tpu.memory_space<vmem>>, vector<2x64xbf16>
    %42 = arith.truncf %40 : vector<64x128xf32> to vector<64x128xbf16>
    %cst_18 = arith.constant dense<0.000000e+00> : vector<2x128xf32>
    %43 = tpu.matmul %41, %42, %cst_18 {dimension_numbers = #tpu.dot_dimension_numbers<[1], [0], [0], [1], [0, 0, 1, 1], [], []>} : vector<2x64xbf16>, vector<64x128xbf16>, vector<2x128xf32> -> vector<2x128xf32>
    %c0_19 = arith.constant 0 : index
    %c0_20 = arith.constant 0 : index
    %44 = vector.load %arg7[%c0_19, %c0_20] : memref<2x1xf32, #tpu.memory_space<vmem>>, vector<2x1xf32>
    %45 = vector.broadcast %44 : vector<2x1xf32> to vector<2x128xf32>
    %46 = arith.addf %43, %45 : vector<2x128xf32>
    %c0_21 = arith.constant 0 : index
    %c0_22 = arith.constant 0 : index
    %47 = vector.load %arg8[%c0_21, %c0_22] : memref<2x128xf32, #tpu.memory_space<vmem>>, vector<2x128xf32>
    tpu.vector_store %arg8[%c0_21, %c0_22], %46 {strides = array<i32>} : memref<2x128xf32, #tpu.memory_space<vmem>>, vector<2x128xf32>,
    return
  }
  func.func @transform_0(%arg0: i32) -> (i32, i32) {
    %c0_i32 = arith.constant 0 : i32
    %c0_i32_0 = arith.constant 0 : i32
    return %c0_i32, %arg0 : i32, i32
  }
  func.func @transform_1(%arg0: i32) -> (i32, i32) {
    %c0_i32 = arith.constant 0 : i32
    %c0_i32_0 = arith.constant 0 : i32
    %c0_i32_1 = arith.constant 0 : i32
    return %c0_i32, %c0_i32_0 : i32, i32
  }
  func.func @transform_2(%arg0: i32) -> (i32, i32) {
    %c0_i32 = arith.constant 0 : i32
    %c0_i32_0 = arith.constant 0 : i32
    %c0_i32_1 = arith.constant 0 : i32
    return %c0_i32, %c0_i32_0 : i32, i32
  }
  func.func @transform_3(%arg0: i32) -> (i32, i32) {
    %c0_i32 = arith.constant 0 : i32
    %c0_i32_0 = arith.constant 0 : i32
    %c0_i32_1 = arith.constant 0 : i32
    return %c0_i32, %c0_i32_0 : i32, i32
  }
  func.func @transform_4(%arg0: i32) -> (i32, i32) {
    %c0_i32 = arith.constant 0 : i32
    %c0_i32_0 = arith.constant 0 : i32
    %c0_i32_1 = arith.constant 0 : i32
    return %c0_i32, %c0_i32_0 : i32, i32
  }
  func.func @transform_5(%arg0: i32) -> (i32, i32) {
    %c0_i32 = arith.constant 0 : i32
    %c0_i32_0 = arith.constant 0 : i32
    %c0_i32_1 = arith.constant 0 : i32
    return %c0_i32, %c0_i32_0 : i32, i32
  }
  func.func @transform_6(%arg0: i32) -> (i32, i32) {
    %c0_i32 = arith.constant 0 : i32
    %c0_i32_0 = arith.constant 0 : i32
    %c0_i32_1 = arith.constant 0 : i32
    return %c0_i32, %c0_i32_0 : i32, i32
  }
  func.func @transform_7(%arg0: i32) -> (i32, i32) {
    %c0_i32 = arith.constant 0 : i32
    %c0_i32_0 = arith.constant 0 : i32
    return %c0_i32, %arg0 : i32, i32
  }
}

</mosaic_0001>

<llo_original>
// kernel: tpu_custom_call.1
$region0: #{tpu_custom_call.1}
  #allocation0 [shape = 'u32[]', space=smem, size = 0x4, offset = 0x4, fixed_abs, tag = 'smem constant byte address 0x4 - core index']
  #allocation1 [shape = 'u32[144,128]{1,0:T(1,128)}', space=vmem, size = 0x12000, scoped, tag = 'internal scratch']
  %s0 = inlined_call_operand.vmem [shape: f32[16,128], index: 0, kind: input, shape index: {}]
  %s1 = inlined_call_operand.vmem [shape: bf16[64,128], index: 1, kind: input, shape index: {}]
  %s2 = inlined_call_operand.vmem [shape: f32[64,1], index: 2, kind: input, shape index: {}]
  %s3 = inlined_call_operand.vmem [shape: bf16[64,64], index: 3, kind: input, shape index: {}]
  %s4 = inlined_call_operand.vmem [shape: f32[64,1], index: 4, kind: input, shape index: {}]
  %s5 = inlined_call_operand.vmem [shape: bf16[2,64], index: 5, kind: input, shape index: {}]
  %s6 = inlined_call_operand.vmem [shape: f32[2,1], index: 6, kind: input, shape index: {}]
  %s7 = inlined_call_operand.hbm [shape: f32[2,128], index: 7, kind: output, shape index: {}]
  %s8 = sld [smem:[#allocation0]]
  $region38: #{tpu_custom_call.1} parent=0
    _
  %s10 = ssub.s32 1, %s8
  %s11 = scalar_select 0, %s10, %s8
  $region1: #{tpu_custom_call.1} parent=0
    #allocation2 [shape = 'u8[1024]{0}', space=vmem, size = 0x400, scoped, tag = 'output window, operand 0, single buffered']
    #allocation3 [shape = 's32[1]{0}', space=sflag, size = 0x4, scoped, tag = 'scoped memory for tpu_custom_call.1']
    %12 = vsyncpa [#allocation3], 0
    // Predicated region
    $region2: #{tpu_custom_call.1} parent=1 // pred_check
      _
    $region3: #{tpu_custom_call.1} parent=1 // pred_check_branch
      %14 = sbr.rel (0) target = $region5
    $region4: #{tpu_custom_call.1} parent=1 // pred_region
      _
    $region5: #{tpu_custom_call.1} parent=1 // pred_fallthru
      _
    // Predicated region
    $region6: #{tpu_custom_call.1} parent=1 // pred_check
      _
    $region7: #{tpu_custom_call.1} parent=1 // pred_check_branch
      %16 = sbr.rel (0) target = $region9
    $region8: #{tpu_custom_call.1} parent=1 // pred_region
      _
    $region9: #{tpu_custom_call.1} parent=1 // pred_fallthru
      _
    // Predicated region
    $region10: #{tpu_custom_call.1} parent=1 // pred_check
      _
    $region11: #{tpu_custom_call.1} parent=1 // pred_check_branch
      %18 = sbr.rel (0) target = $region13
    $region12: #{tpu_custom_call.1} parent=1 // pred_region
      _
    $region13: #{tpu_custom_call.1} parent=1 // pred_fallthru
      _
    // Predicated region
    $region14: #{tpu_custom_call.1} parent=1 // pred_check
      _
    $region15: #{tpu_custom_call.1} parent=1 // pred_check_branch
      %20 = sbr.rel (0) target = $region17
    $region16: #{tpu_custom_call.1} parent=1 // pred_region
      _
    $region17: #{tpu_custom_call.1} parent=1 // pred_fallthru
      _
    // Predicated region
    $region18: #{tpu_custom_call.1} parent=1 // pred_check
      _
    $region19: #{tpu_custom_call.1} parent=1 // pred_check_branch
      %22 = sbr.rel (0) target = $region21
    $region20: #{tpu_custom_call.1} parent=1 // pred_region
      _
    $region21: #{tpu_custom_call.1} parent=1 // pred_fallthru
      _
    // Predicated region
    $region22: #{tpu_custom_call.1} parent=1 // pred_check
      _
    $region23: #{tpu_custom_call.1} parent=1 // pred_check_branch
      %24 = sbr.rel (0) target = $region25
    $region24: #{tpu_custom_call.1} parent=1 // pred_region
      _
    $region25: #{tpu_custom_call.1} parent=1 // pred_fallthru
      _
    // Predicated region
    $region26: #{tpu_custom_call.1} parent=1 // pred_check
      _
    $region27: #{tpu_custom_call.1} parent=1 // pred_check_branch
      %26 = sbr.rel (0) target = $region29
    $region28: #{tpu_custom_call.1} parent=1 // pred_region
      _
    $region29: #{tpu_custom_call.1} parent=1 // pred_fallthru
      _
    %v28 = vld [vmem:[%s0] sm:$0xff]
    %v29 = vld [vmem:[%s0 + $0x8] sm:$0xff]
    %v30 = vmul.f32 %v28, 3.1415927
    %v31 = vmul.f32 %v29, 3.1415927
    %v32 = vmul.f32 %v28, 6.2831855
    %v33 = vmul.f32 %v29, 6.2831855
    %v34 = vmul.f32 %v28, 12.566371
    %v35 = vmul.f32 %v29, 12.566371
    %v36 = vmul.f32 %v28, 25.132742
    %v37 = vmul.f32 %v29, 25.132742
    %v38 = vand.u32 2147483647, %v30
    %vm39 = vcmp.le.f32.partialorder %v38, 0.7853982
    %vm40 = vcmp.lt.s32.totalorder %v30, 0
    %v41 = vand.u32 %v30, 2139095040
    %v42 = vshrl.u32 %v41, 23
    %v43 = vsub.s32 %v42, 127
    %v44 = vand.u32 2147483647, %v30
    %v45 = vand.u32 %v44, 8388607
    %v46 = vor.u32 %v45, 8388608
    %v47 = vsub.s32 0, %v46
    %v48 = vadd.s32 %v43, 1
    %vm49 = vcmp.gt.s32.totalorder %v48, 0
    %v50 = vsel %vm49, %v48, 0
    %v51 = vshrl.u32 %v50, 5
    %v52 = vand.u32 %v50, 31
    %v53 = vsub.s32 32, %v52
    %v54 = vshrl.u32 683565275, %v53
    %v55 = vshll.u32 683565275, %v52
    %v56 = vshrl.u32 2475754826, %v53
    %v57 = vor.u32 %v55, %v56
    %v58 = vshll.u32 2475754826, %v52
    %v59 = vshrl.u32 2131351028, %v53
    %v60 = vor.u32 %v58, %v59
    %v61 = vshll.u32 2131351028, %v52
    %v62 = vshrl.u32 2102212464, %v53
    %v63 = vor.u32 %v61, %v62
    %v64 = vshll.u32 2102212464, %v52
    %v65 = vshrl.u32 920167782, %v53
    %v66 = vor.u32 %v64, %v65
    %v67 = vshll.u32 920167782, %v52
    %v68 = vshrl.u32 1326507024, %v53
    %v69 = vor.u32 %v67, %v68
    %vm70 = vcmp.lt.s32.totalorder %v51, 1
    %vm71 = vcmp.lt.s32.totalorder %v51, 2
    %vm72 = vcmp.lt.s32.totalorder %v51, 3
    %vm73 = vcmp.lt.s32.totalorder %v51, 4
    %v74 = vsel %vm70, %v54, %v57
    %v75 = vsel %vm73, %v63, 2102212464
    %v76 = vsel %vm72, %v60, %v75
    %v77 = vsel %vm71, %v74, %v76
    %v78 = vsel %vm70, %v57, %v60
    %v79 = vsel %vm73, %v66, 920167782
    %v80 = vsel %vm72, %v63, %v79
    %v81 = vsel %vm71, %v78, %v80
    %v82 = vsel %vm70, %v60, %v63
    %v83 = vsel %vm73, %v69, 1326507024
    %v84 = vsel %vm72, %v66, %v83
    %v85 = vsel %vm71, %v82, %v84
    %v86 = vshll.u32 %v46, 8
    %v87 = vmul.u32.u64.compose %v86, %v85
    %v88 = vextract.low.u32 %v87
    %v89 = vextract.high.u32 %v87
    %v90 = vmul.u32.u64.compose %v86, %v81
    %v91 = vextract.low.u32 %v90
    %v92 = vextract.high.u32 %v90
    %v93 = vmul.u32 %v86, %v77
    %v94 = vadd.s32 %v89, %v91
    %vm95 = vc.u32 %v89, %v91
    %v96 = vadd.s32 %v92, 1
    %v97 = vsel %vm95, %v96, %v92
    %v98 = vadd.s32 %v93, %v97
    %v99 = vadd.s32 %v98, 536870912
    %v100 = vshrl.u32 %v99, 30
    %v101 = vshll.u32 %v100, 30
    %v102 = vsub.s32 %v98, %v101
    %vm103 = vcmp.lt.s32.totalorder %v102, 0
    %v104 = vsub.s32 0, %v102
    %v105 = vsel %vm103, %v104, %v102
    %v106 = vclz %v105
    %v107 = vsub.s32 %v106, 2
    %vm108 = vcmp.gt.s32.totalorder 0, %v107
    %v109 = vsel %vm108, 0, %v107
    %v110 = vsub.s32 32, %v109
    %v111 = vshll.u32 %v102, %v109
    %v112 = vshrl.u32 %v94, %v110
    %v113 = vor.u32 %v111, %v112
    %v114 = vsub.s32 4294967266, %v109
    %v115 = vadd.s32 %v114, 127
    %v116 = vshll.u32 %v115, 23
    %v117 = vor.u32 4788187, %v116
    %v118 = vand.u32 2147483647, %v117
    %v120 = vcvt.s32.f32 %v113
    %v121 = vmul.f32 %v120, %v118
    %v122 = vxor.u32 %v121, 2147483648
    %v123 = vsel %vm40, %v122, %v121
    %v124 = vsub.s32 4, %v100
    %v125 = vsel %vm40, %v124, %v100
    %v126 = vsel %vm39, %v30, %v123
    %v127 = vsel %vm39, 0, %v125
    %v128 = vcosq.f32.pop %v126
    %v129 = vsinq.f32.pop %v126
    %vm130 = vweird.f32 %v30
    %v131 = vadd.s32 %v127, 3
    %v132 = vand.u32 %v131, 3
    %vm133 = vcmp.lt.s32.totalorder %v132, 2
    %vm134 = vcmp.eq.s32.totalorder %v132, 0
    %v135 = vxor.u32 %v129, 2147483648
    %v136 = vsel %vm134, %v128, %v135
    %vm137 = vcmp.eq.s32.totalorder %v132, 2
    %v138 = vxor.u32 %v128, 2147483648
    %v139 = vsel %vm137, %v138, %v129
    %v140 = vsel %vm133, %v136, %v139
    %v141 = vsel %vm130, nan, %v140
    %v142 = vand.u32 2147483647, %v31
    %vm143 = vcmp.le.f32.partialorder %v142, 0.7853982
    %vm144 = vcmp.lt.s32.totalorder %v31, 0
    %v145 = vand.u32 %v31, 2139095040
    %v146 = vshrl.u32 %v145, 23
    %v147 = vsub.s32 %v146, 127
    %v148 = vand.u32 2147483647, %v31
    %v149 = vand.u32 %v148, 8388607
    %v150 = vor.u32 %v149, 8388608
    %v151 = vsub.s32 0, %v150
    %v152 = vadd.s32 %v147, 1
    %vm153 = vcmp.gt.s32.totalorder %v152, 0
    %v154 = vsel %vm153, %v152, 0
    %v155 = vshrl.u32 %v154, 5
    %v156 = vand.u32 %v154, 31
    %v157 = vsub.s32 32, %v156
    %v158 = vshrl.u32 683565275, %v157
    %v159 = vshll.u32 683565275, %v156
    %v160 = vshrl.u32 2475754826, %v157
    %v161 = vor.u32 %v159, %v160
    %v162 = vshll.u32 2475754826, %v156
    %v163 = vshrl.u32 2131351028, %v157
    %v164 = vor.u32 %v162, %v163
    %v165 = vshll.u32 2131351028, %v156
    %v166 = vshrl.u32 2102212464, %v157
    %v167 = vor.u32 %v165, %v166
    %v168 = vshll.u32 2102212464, %v156
    %v169 = vshrl.u32 920167782, %v157
    %v170 = vor.u32 %v168, %v169
    %v171 = vshll.u32 920167782, %v156
    %v172 = vshrl.u32 1326507024, %v157
    %v173 = vor.u32 %v171, %v172
    %vm174 = vcmp.lt.s32.totalorder %v155, 1
    %vm175 = vcmp.lt.s32.totalorder %v155, 2
    %vm176 = vcmp.lt.s32.totalorder %v155, 3
    %vm177 = vcmp.lt.s32.totalorder %v155, 4
    %v178 = vsel %vm174, %v158, %v161
    %v179 = vsel %vm177, %v167, 2102212464
    %v180 = vsel %vm176, %v164, %v179
    %v181 = vsel %vm175, %v178, %v180
    %v182 = vsel %vm174, %v161, %v164
    %v183 = vsel %vm177, %v170, 920167782
    %v184 = vsel %vm176, %v167, %v183
    %v185 = vsel %vm175, %v182, %v184
    %v186 = vsel %vm174, %v164, %v167
    %v187 = vsel %vm177, %v173, 1326507024
    %v188 = vsel %vm176, %v170, %v187
    %v189 = vsel %vm175, %v186, %v188
    %v190 = vshll.u32 %v150, 8
    %v191 = vmul.u32.u64.compose %v190, %v189
    %v192 = vextract.low.u32 %v191
    %v193 = vextract.high.u32 %v191
    %v194 = vmul.u32.u64.compose %v190, %v185
    %v195 = vextract.low.u32 %v194
    %v196 = vextract.high.u32 %v194
    %v197 = vmul.u32 %v190, %v181
    %v198 = vadd.s32 %v193, %v195
    %vm199 = vc.u32 %v193, %v195
    %v200 = vadd.s32 %v196, 1
    %v201 = vsel %vm199, %v200, %v196
    %v202 = vadd.s32 %v197, %v201
    %v203 = vadd.s32 %v202, 536870912
    %v204 = vshrl.u32 %v203, 30
    %v205 = vshll.u32 %v204, 30
    %v206 = vsub.s32 %v202, %v205
    %vm207 = vcmp.lt.s32.totalorder %v206, 0
    %v208 = vsub.s32 0, %v206
    %v209 = vsel %vm207, %v208, %v206
    %v210 = vclz %v209
    %v211 = vsub.s32 %v210, 2
    %vm212 = vcmp.gt.s32.totalorder 0, %v211
    %v213 = vsel %vm212, 0, %v211
    %v214 = vsub.s32 32, %v213
    %v215 = vshll.u32 %v206, %v213
    %v216 = vshrl.u32 %v198, %v214
    %v217 = vor.u32 %v215, %v216
    %v218 = vsub.s32 4294967266, %v213
    %v219 = vadd.s32 %v218, 127
    %v220 = vshll.u32 %v219, 23
    %v221 = vor.u32 4788187, %v220
    %v222 = vand.u32 2147483647, %v221
    %v224 = vcvt.s32.f32 %v217
    %v225 = vmul.f32 %v224, %v222
    %v226 = vxor.u32 %v225, 2147483648
    %v227 = vsel %vm144, %v226, %v225
    %v228 = vsub.s32 4, %v204
    %v229 = vsel %vm144, %v228, %v204
    %v230 = vsel %vm143, %v31, %v227
    %v231 = vsel %vm143, 0, %v229
    %v232 = vcosq.f32.pop %v230
    %v233 = vsinq.f32.pop %v230
    %vm234 = vweird.f32 %v31
    %v235 = vadd.s32 %v231, 3
    %v236 = vand.u32 %v235, 3
    %vm237 = vcmp.lt.s32.totalorder %v236, 2
    %vm238 = vcmp.eq.s32.totalorder %v236, 0
    %v239 = vxor.u32 %v233, 2147483648
    %v240 = vsel %vm238, %v232, %v239
    %vm241 = vcmp.eq.s32.totalorder %v236, 2
    %v242 = vxor.u32 %v232, 2147483648
    %v243 = vsel %vm241, %v242, %v233
    %v244 = vsel %vm237, %v240, %v243
    %v245 = vsel %vm234, nan, %v244
    %v246 = vand.u32 2147483647, %v32
    %vm247 = vcmp.le.f32.partialorder %v246, 0.7853982
    %vm248 = vcmp.lt.s32.totalorder %v32, 0
    %v249 = vand.u32 %v32, 2139095040
    %v250 = vshrl.u32 %v249, 23
    %v251 = vsub.s32 %v250, 127
    %v252 = vand.u32 2147483647, %v32
    %v253 = vand.u32 %v252, 8388607
    %v254 = vor.u32 %v253, 8388608
    %v255 = vsub.s32 0, %v254
    %v256 = vadd.s32 %v251, 1
    %vm257 = vcmp.gt.s32.totalorder %v256, 0
    %v258 = vsel %vm257, %v256, 0
    %v259 = vshrl.u32 %v258, 5
    %v260 = vand.u32 %v258, 31
    %v261 = vsub.s32 32, %v260
    %v262 = vshrl.u32 683565275, %v261
    %v263 = vshll.u32 683565275, %v260
    %v264 = vshrl.u32 2475754826, %v261
    %v265 = vor.u32 %v263, %v264
    %v266 = vshll.u32 2475754826, %v260
    %v267 = vshrl.u32 2131351028, %v261
    %v268 = vor.u32 %v266, %v267
    %v269 = vshll.u32 2131351028, %v260
    %v270 = vshrl.u32 2102212464, %v261
    %v271 = vor.u32 %v269, %v270
    %v272 = vshll.u32 2102212464, %v260
    %v273 = vshrl.u32 920167782, %v261
    %v274 = vor.u32 %v272, %v273
    %v275 = vshll.u32 920167782, %v260
    %v276 = vshrl.u32 1326507024, %v261
    %v277 = vor.u32 %v275, %v276
    %vm278 = vcmp.lt.s32.totalorder %v259, 1
    %vm279 = vcmp.lt.s32.totalorder %v259, 2
    %vm280 = vcmp.lt.s32.totalorder %v259, 3
    %vm281 = vcmp.lt.s32.totalorder %v259, 4
    %v282 = vsel %vm278, %v262, %v265
    %v283 = vsel %vm281, %v271, 2102212464
    %v284 = vsel %vm280, %v268, %v283
    %v285 = vsel %vm279, %v282, %v284
    %v286 = vsel %vm278, %v265, %v268
    %v287 = vsel %vm281, %v274, 920167782
    %v288 = vsel %vm280, %v271, %v287
    %v289 = vsel %vm279, %v286, %v288
    %v290 = vsel %vm278, %v268, %v271
    %v291 = vsel %vm281, %v277, 1326507024
    %v292 = vsel %vm280, %v274, %v291
    %v293 = vsel %vm279, %v290, %v292
    %v294 = vshll.u32 %v254, 8
    %v295 = vmul.u32.u64.compose %v294, %v293
    %v296 = vextract.low.u32 %v295
    %v297 = vextract.high.u32 %v295
    %v298 = vmul.u32.u64.compose %v294, %v289
    %v299 = vextract.low.u32 %v298
    %v300 = vextract.high.u32 %v298
    %v301 = vmul.u32 %v294, %v285
    %v302 = vadd.s32 %v297, %v299
    %vm303 = vc.u32 %v297, %v299
    %v304 = vadd.s32 %v300, 1
    %v305 = vsel %vm303, %v304, %v300
    %v306 = vadd.s32 %v301, %v305
    %v307 = vadd.s32 %v306, 536870912
    %v308 = vshrl.u32 %v307, 30
    %v309 = vshll.u32 %v308, 30
    %v310 = vsub.s32 %v306, %v309
    %vm311 = vcmp.lt.s32.totalorder %v310, 0
    %v312 = vsub.s32 0, %v310
    %v313 = vsel %vm311, %v312, %v310
    %v314 = vclz %v313
    %v315 = vsub.s32 %v314, 2
    %vm316 = vcmp.gt.s32.totalorder 0, %v315
    %v317 = vsel %vm316, 0, %v315
    %v318 = vsub.s32 32, %v317
    %v319 = vshll.u32 %v310, %v317
    %v320 = vshrl.u32 %v302, %v318
    %v321 = vor.u32 %v319, %v320
    %v322 = vsub.s32 4294967266, %v317
    %v323 = vadd.s32 %v322, 127
    %v324 = vshll.u32 %v323, 23
    %v325 = vor.u32 4788187, %v324
    %v326 = vand.u32 2147483647, %v325
    %v328 = vcvt.s32.f32 %v321
    %v329 = vmul.f32 %v328, %v326
    %v330 = vxor.u32 %v329, 2147483648
    %v331 = vsel %vm248, %v330, %v329
    %v332 = vsub.s32 4, %v308
    %v333 = vsel %vm248, %v332, %v308
    %v334 = vsel %vm247, %v32, %v331
    %v335 = vsel %vm247, 0, %v333
    %v336 = vcosq.f32.pop %v334
    %v337 = vsinq.f32.pop %v334
    %vm338 = vweird.f32 %v32
    %v339 = vadd.s32 %v335, 3
    %v340 = vand.u32 %v339, 3
    %vm341 = vcmp.lt.s32.totalorder %v340, 2
    %vm342 = vcmp.eq.s32.totalorder %v340, 0
    %v343 = vxor.u32 %v337, 2147483648
    %v344 = vsel %vm342, %v336, %v343
    %vm345 = vcmp.eq.s32.totalorder %v340, 2
    %v346 = vxor.u32 %v336, 2147483648
    %v347 = vsel %vm345, %v346, %v337
    %v348 = vsel %vm341, %v344, %v347
    %v349 = vsel %vm338, nan, %v348
    %v350 = vand.u32 2147483647, %v33
    %vm351 = vcmp.le.f32.partialorder %v350, 0.7853982
    %vm352 = vcmp.lt.s32.totalorder %v33, 0
    %v353 = vand.u32 %v33, 2139095040
    %v354 = vshrl.u32 %v353, 23
    %v355 = vsub.s32 %v354, 127
    %v356 = vand.u32 2147483647, %v33
    %v357 = vand.u32 %v356, 8388607
    %v358 = vor.u32 %v357, 8388608
    %v359 = vsub.s32 0, %v358
    %v360 = vadd.s32 %v355, 1
    %vm361 = vcmp.gt.s32.totalorder %v360, 0
    %v362 = vsel %vm361, %v360, 0
    %v363 = vshrl.u32 %v362, 5
    %v364 = vand.u32 %v362, 31
    %v365 = vsub.s32 32, %v364
    %v366 = vshrl.u32 683565275, %v365
    %v367 = vshll.u32 683565275, %v364
    %v368 = vshrl.u32 2475754826, %v365
    %v369 = vor.u32 %v367, %v368
    %v370 = vshll.u32 2475754826, %v364
    %v371 = vshrl.u32 2131351028, %v365
    %v372 = vor.u32 %v370, %v371
    %v373 = vshll.u32 2131351028, %v364
    %v374 = vshrl.u32 2102212464, %v365
    %v375 = vor.u32 %v373, %v374
    %v376 = vshll.u32 2102212464, %v364
    %v377 = vshrl.u32 920167782, %v365
    %v378 = vor.u32 %v376, %v377
    %v379 = vshll.u32 920167782, %v364
    %v380 = vshrl.u32 1326507024, %v365
    %v381 = vor.u32 %v379, %v380
    %vm382 = vcmp.lt.s32.totalorder %v363, 1
    %vm383 = vcmp.lt.s32.totalorder %v363, 2
    %vm384 = vcmp.lt.s32.totalorder %v363, 3
    %vm385 = vcmp.lt.s32.totalorder %v363, 4
    %v386 = vsel %vm382, %v366, %v369
    %v387 = vsel %vm385, %v375, 2102212464
    %v388 = vsel %vm384, %v372, %v387
    %v389 = vsel %vm383, %v386, %v388
    %v390 = vsel %vm382, %v369, %v372
    %v391 = vsel %vm385, %v378, 920167782
    %v392 = vsel %vm384, %v375, %v391
    %v393 = vsel %vm383, %v390, %v392
    %v394 = vsel %vm382, %v372, %v375
    %v395 = vsel %vm385, %v381, 1326507024
    %v396 = vsel %vm384, %v378, %v395
    %v397 = vsel %vm383, %v394, %v396
    %v398 = vshll.u32 %v358, 8
    %v399 = vmul.u32.u64.compose %v398, %v397
    %v400 = vextract.low.u32 %v399
    %v401 = vextract.high.u32 %v399
    %v402 = vmul.u32.u64.compose %v398, %v393
    %v403 = vextract.low.u32 %v402
    %v404 = vextract.high.u32 %v402
    %v405 = vmul.u32 %v398, %v389
    %v406 = vadd.s32 %v401, %v403
    %vm407 = vc.u32 %v401, %v403
    %v408 = vadd.s32 %v404, 1
    %v409 = vsel %vm407, %v408, %v404
    %v410 = vadd.s32 %v405, %v409
    %v411 = vadd.s32 %v410, 536870912
    %v412 = vshrl.u32 %v411, 30
    %v413 = vshll.u32 %v412, 30
    %v414 = vsub.s32 %v410, %v413
    %vm415 = vcmp.lt.s32.totalorder %v414, 0
    %v416 = vsub.s32 0, %v414
    %v417 = vsel %vm415, %v416, %v414
    %v418 = vclz %v417
    %v419 = vsub.s32 %v418, 2
    %vm420 = vcmp.gt.s32.totalorder 0, %v419
    %v421 = vsel %vm420, 0, %v419
    %v422 = vsub.s32 32, %v421
    %v423 = vshll.u32 %v414, %v421
    %v424 = vshrl.u32 %v406, %v422
    %v425 = vor.u32 %v423, %v424
    %v426 = vsub.s32 4294967266, %v421
    %v427 = vadd.s32 %v426, 127
    %v428 = vshll.u32 %v427, 23
    %v429 = vor.u32 4788187, %v428
    %v430 = vand.u32 2147483647, %v429
    %v432 = vcvt.s32.f32 %v425
    %v433 = vmul.f32 %v432, %v430
    %v434 = vxor.u32 %v433, 2147483648
    %v435 = vsel %vm352, %v434, %v433
    %v436 = vsub.s32 4, %v412
    %v437 = vsel %vm352, %v436, %v412
    %v438 = vsel %vm351, %v33, %v435
    %v439 = vsel %vm351, 0, %v437
    %v440 = vcosq.f32.pop %v438
    %v441 = vsinq.f32.pop %v438
    %vm442 = vweird.f32 %v33
    %v443 = vadd.s32 %v439, 3
    %v444 = vand.u32 %v443, 3
    %vm445 = vcmp.lt.s32.totalorder %v444, 2
    %vm446 = vcmp.eq.s32.totalorder %v444, 0
    %v447 = vxor.u32 %v441, 2147483648
    %v448 = vsel %vm446, %v440, %v447
    %vm449 = vcmp.eq.s32.totalorder %v444, 2
    %v450 = vxor.u32 %v440, 2147483648
    %v451 = vsel %vm449, %v450, %v441
    %v452 = vsel %vm445, %v448, %v451
    %v453 = vsel %vm442, nan, %v452
    %v454 = vand.u32 2147483647, %v34
    %vm455 = vcmp.le.f32.partialorder %v454, 0.7853982
    %vm456 = vcmp.lt.s32.totalorder %v34, 0
    %v457 = vand.u32 %v34, 2139095040
    %v458 = vshrl.u32 %v457, 23
    %v459 = vsub.s32 %v458, 127
    %v460 = vand.u32 2147483647, %v34
    %v461 = vand.u32 %v460, 8388607
    %v462 = vor.u32 %v461, 8388608
    %v463 = vsub.s32 0, %v462
    %v464 = vadd.s32 %v459, 1
    %vm465 = vcmp.gt.s32.totalorder %v464, 0
    %v466 = vsel %vm465, %v464, 0
    %v467 = vshrl.u32 %v466, 5
    %v468 = vand.u32 %v466, 31
    %v469 = vsub.s32 32, %v468
    %v470 = vshrl.u32 683565275, %v469
    %v471 = vshll.u32 683565275, %v468
    %v472 = vshrl.u32 2475754826, %v469
    %v473 = vor.u32 %v471, %v472
    %v474 = vshll.u32 2475754826, %v468
    %v475 = vshrl.u32 2131351028, %v469
    %v476 = vor.u32 %v474, %v475
    %v477 = vshll.u32 2131351028, %v468
    %v478 = vshrl.u32 2102212464, %v469
    %v479 = vor.u32 %v477, %v478
    %v480 = vshll.u32 2102212464, %v468
    %v481 = vshrl.u32 920167782, %v469
    %v482 = vor.u32 %v480, %v481
    %v483 = vshll.u32 920167782, %v468
    %v484 = vshrl.u32 1326507024, %v469
    %v485 = vor.u32 %v483, %v484
    %vm486 = vcmp.lt.s32.totalorder %v467, 1
    %vm487 = vcmp.lt.s32.totalorder %v467, 2
    %vm488 = vcmp.lt.s32.totalorder %v467, 3
    %vm489 = vcmp.lt.s32.totalorder %v467, 4
    %v490 = vsel %vm486, %v470, %v473
    %v491 = vsel %vm489, %v479, 2102212464
    %v492 = vsel %vm488, %v476, %v491
    %v493 = vsel %vm487, %v490, %v492
    %v494 = vsel %vm486, %v473, %v476
    %v495 = vsel %vm489, %v482, 920167782
    %v496 = vsel %vm488, %v479, %v495
    %v497 = vsel %vm487, %v494, %v496
    %v498 = vsel %vm486, %v476, %v479
    %v499 = vsel %vm489, %v485, 1326507024
    %v500 = vsel %vm488, %v482, %v499
    %v501 = vsel %vm487, %v498, %v500
    %v502 = vshll.u32 %v462, 8
    %v503 = vmul.u32.u64.compose %v502, %v501
    %v504 = vextract.low.u32 %v503
    %v505 = vextract.high.u32 %v503
    %v506 = vmul.u32.u64.compose %v502, %v497
    %v507 = vextract.low.u32 %v506
    %v508 = vextract.high.u32 %v506
    %v509 = vmul.u32 %v502, %v493
    %v510 = vadd.s32 %v505, %v507
    %vm511 = vc.u32 %v505, %v507
    %v512 = vadd.s32 %v508, 1
    %v513 = vsel %vm511, %v512, %v508
    %v514 = vadd.s32 %v509, %v513
    %v515 = vadd.s32 %v514, 536870912
    %v516 = vshrl.u32 %v515, 30
    %v517 = vshll.u32 %v516, 30
    %v518 = vsub.s32 %v514, %v517
    %vm519 = vcmp.lt.s32.totalorder %v518, 0
    %v520 = vsub.s32 0, %v518
    %v521 = vsel %vm519, %v520, %v518
    %v522 = vclz %v521
    %v523 = vsub.s32 %v522, 2
    %vm524 = vcmp.gt.s32.totalorder 0, %v523
    %v525 = vsel %vm524, 0, %v523
    %v526 = vsub.s32 32, %v525
    %v527 = vshll.u32 %v518, %v525
    %v528 = vshrl.u32 %v510, %v526
    %v529 = vor.u32 %v527, %v528
    %v530 = vsub.s32 4294967266, %v525
    %v531 = vadd.s32 %v530, 127
    %v532 = vshll.u32 %v531, 23
    %v533 = vor.u32 4788187, %v532
    %v534 = vand.u32 2147483647, %v533
    %v536 = vcvt.s32.f32 %v529
    %v537 = vmul.f32 %v536, %v534
    %v538 = vxor.u32 %v537, 2147483648
    %v539 = vsel %vm456, %v538, %v537
    %v540 = vsub.s32 4, %v516
    %v541 = vsel %vm456, %v540, %v516
    %v542 = vsel %vm455, %v34, %v539
    %v543 = vsel %vm455, 0, %v541
    %v544 = vcosq.f32.pop %v542
    %v545 = vsinq.f32.pop %v542
    %vm546 = vweird.f32 %v34
    %v547 = vadd.s32 %v543, 3
    %v548 = vand.u32 %v547, 3
    %vm549 = vcmp.lt.s32.totalorder %v548, 2
    %vm550 = vcmp.eq.s32.totalorder %v548, 0
    %v551 = vxor.u32 %v545, 2147483648
    %v552 = vsel %vm550, %v544, %v551
    %vm553 = vcmp.eq.s32.totalorder %v548, 2
    %v554 = vxor.u32 %v544, 2147483648
    %v555 = vsel %vm553, %v554, %v545
    %v556 = vsel %vm549, %v552, %v555
    %v557 = vsel %vm546, nan, %v556
    %v558 = vand.u32 2147483647, %v35
    %vm559 = vcmp.le.f32.partialorder %v558, 0.7853982
    %vm560 = vcmp.lt.s32.totalorder %v35, 0
    %v561 = vand.u32 %v35, 2139095040
    %v562 = vshrl.u32 %v561, 23
    %v563 = vsub.s32 %v562, 127
    %v564 = vand.u32 2147483647, %v35
    %v565 = vand.u32 %v564, 8388607
    %v566 = vor.u32 %v565, 8388608
    %v567 = vsub.s32 0, %v566
    %v568 = vadd.s32 %v563, 1
    %vm569 = vcmp.gt.s32.totalorder %v568, 0
    %v570 = vsel %vm569, %v568, 0
    %v571 = vshrl.u32 %v570, 5
    %v572 = vand.u32 %v570, 31
    %v573 = vsub.s32 32, %v572
    %v574 = vshrl.u32 683565275, %v573
    %v575 = vshll.u32 683565275, %v572
    %v576 = vshrl.u32 2475754826, %v573
    %v577 = vor.u32 %v575, %v576
    %v578 = vshll.u32 2475754826, %v572
    %v579 = vshrl.u32 2131351028, %v573
    %v580 = vor.u32 %v578, %v579
    %v581 = vshll.u32 2131351028, %v572
    %v582 = vshrl.u32 2102212464, %v573
    %v583 = vor.u32 %v581, %v582
    %v584 = vshll.u32 2102212464, %v572
    %v585 = vshrl.u32 920167782, %v573
    %v586 = vor.u32 %v584, %v585
    %v587 = vshll.u32 920167782, %v572
    %v588 = vshrl.u32 1326507024, %v573
    %v589 = vor.u32 %v587, %v588
    %vm590 = vcmp.lt.s32.totalorder %v571, 1
    %vm591 = vcmp.lt.s32.totalorder %v571, 2
    %vm592 = vcmp.lt.s32.totalorder %v571, 3
    %vm593 = vcmp.lt.s32.totalorder %v571, 4
    %v594 = vsel %vm590, %v574, %v577
    %v595 = vsel %vm593, %v583, 2102212464
    %v596 = vsel %vm592, %v580, %v595
    %v597 = vsel %vm591, %v594, %v596
    %v598 = vsel %vm590, %v577, %v580
    %v599 = vsel %vm593, %v586, 920167782
    %v600 = vsel %vm592, %v583, %v599
    %v601 = vsel %vm591, %v598, %v600
    %v602 = vsel %vm590, %v580, %v583
    %v603 = vsel %vm593, %v589, 1326507024
    %v604 = vsel %vm592, %v586, %v603
    %v605 = vsel %vm591, %v602, %v604
    %v606 = vshll.u32 %v566, 8
    %v607 = vmul.u32.u64.compose %v606, %v605
    %v608 = vextract.low.u32 %v607
    %v609 = vextract.high.u32 %v607
    %v610 = vmul.u32.u64.compose %v606, %v601
    %v611 = vextract.low.u32 %v610
    %v612 = vextract.high.u32 %v610
    %v613 = vmul.u32 %v606, %v597
    %v614 = vadd.s32 %v609, %v611
    %vm615 = vc.u32 %v609, %v611
    %v616 = vadd.s32 %v612, 1
    %v617 = vsel %vm615, %v616, %v612
    %v618 = vadd.s32 %v613, %v617
    %v619 = vadd.s32 %v618, 536870912
    %v620 = vshrl.u32 %v619, 30
    %v621 = vshll.u32 %v620, 30
    %v622 = vsub.s32 %v618, %v621
    %vm623 = vcmp.lt.s32.totalorder %v622, 0
    %v624 = vsub.s32 0, %v622
    %v625 = vsel %vm623, %v624, %v622
    %v626 = vclz %v625
    %v627 = vsub.s32 %v626, 2
    %vm628 = vcmp.gt.s32.totalorder 0, %v627
    %v629 = vsel %vm628, 0, %v627
    %v630 = vsub.s32 32, %v629
    %v631 = vshll.u32 %v622, %v629
    %v632 = vshrl.u32 %v614, %v630
    %v633 = vor.u32 %v631, %v632
    %v634 = vsub.s32 4294967266, %v629
    %v635 = vadd.s32 %v634, 127
    %v636 = vshll.u32 %v635, 23
    %v637 = vor.u32 4788187, %v636
    %v638 = vand.u32 2147483647, %v637
    %v640 = vcvt.s32.f32 %v633
    %v641 = vmul.f32 %v640, %v638
    %v642 = vxor.u32 %v641, 2147483648
    %v643 = vsel %vm560, %v642, %v641
    %v644 = vsub.s32 4, %v620
    %v645 = vsel %vm560, %v644, %v620
    %v646 = vsel %vm559, %v35, %v643
    %v647 = vsel %vm559, 0, %v645
    %v648 = vcosq.f32.pop %v646
    %v649 = vsinq.f32.pop %v646
    %vm650 = vweird.f32 %v35
    %v651 = vadd.s32 %v647, 3
    %v652 = vand.u32 %v651, 3
    %vm653 = vcmp.lt.s32.totalorder %v652, 2
    %vm654 = vcmp.eq.s32.totalorder %v652, 0
    %v655 = vxor.u32 %v649, 2147483648
    %v656 = vsel %vm654, %v648, %v655
    %vm657 = vcmp.eq.s32.totalorder %v652, 2
    %v658 = vxor.u32 %v648, 2147483648
    %v659 = vsel %vm657, %v658, %v649
    %v660 = vsel %vm653, %v656, %v659
    %v661 = vsel %vm650, nan, %v660
    %v662 = vand.u32 2147483647, %v36
    %vm663 = vcmp.le.f32.partialorder %v662, 0.7853982
    %vm664 = vcmp.lt.s32.totalorder %v36, 0
    %v665 = vand.u32 %v36, 2139095040
    %v666 = vshrl.u32 %v665, 23
    %v667 = vsub.s32 %v666, 127
    %v668 = vand.u32 2147483647, %v36
    %v669 = vand.u32 %v668, 8388607
    %v670 = vor.u32 %v669, 8388608
    %v671 = vsub.s32 0, %v670
    %v672 = vadd.s32 %v667, 1
    %vm673 = vcmp.gt.s32.totalorder %v672, 0
    %v674 = vsel %vm673, %v672, 0
    %v675 = vshrl.u32 %v674, 5
    %v676 = vand.u32 %v674, 31
    %v677 = vsub.s32 32, %v676
    %v678 = vshrl.u32 683565275, %v677
    %v679 = vshll.u32 683565275, %v676
    %v680 = vshrl.u32 2475754826, %v677
    %v681 = vor.u32 %v679, %v680
    %v682 = vshll.u32 2475754826, %v676
    %v683 = vshrl.u32 2131351028, %v677
    %v684 = vor.u32 %v682, %v683
    %v685 = vshll.u32 2131351028, %v676
    %v686 = vshrl.u32 2102212464, %v677
    %v687 = vor.u32 %v685, %v686
    %v688 = vshll.u32 2102212464, %v676
    %v689 = vshrl.u32 920167782, %v677
    %v690 = vor.u32 %v688, %v689
    %v691 = vshll.u32 920167782, %v676
    %v692 = vshrl.u32 1326507024, %v677
    %v693 = vor.u32 %v691, %v692
    %vm694 = vcmp.lt.s32.totalorder %v675, 1
    %vm695 = vcmp.lt.s32.totalorder %v675, 2
    %vm696 = vcmp.lt.s32.totalorder %v675, 3
    %vm697 = vcmp.lt.s32.totalorder %v675, 4
    %v698 = vsel %vm694, %v678, %v681
    %v699 = vsel %vm697, %v687, 2102212464
    %v700 = vsel %vm696, %v684, %v699
    %v701 = vsel %vm695, %v698, %v700
    %v702 = vsel %vm694, %v681, %v684
    %v703 = vsel %vm697, %v690, 920167782
    %v704 = vsel %vm696, %v687, %v703
    %v705 = vsel %vm695, %v702, %v704
    %v706 = vsel %vm694, %v684, %v687
    %v707 = vsel %vm697, %v693, 1326507024
    %v708 = vsel %vm696, %v690, %v707
    %v709 = vsel %vm695, %v706, %v708
    %v710 = vshll.u32 %v670, 8
    %v711 = vmul.u32.u64.compose %v710, %v709
    %v712 = vextract.low.u32 %v711
    %v713 = vextract.high.u32 %v711
    %v714 = vmul.u32.u64.compose %v710, %v705
    %v715 = vextract.low.u32 %v714
    %v716 = vextract.high.u32 %v714
    %v717 = vmul.u32 %v710, %v701
    %v718 = vadd.s32 %v713, %v715
    %vm719 = vc.u32 %v713, %v715
    %v720 = vadd.s32 %v716, 1
    %v721 = vsel %vm719, %v720, %v716
    %v722 = vadd.s32 %v717, %v721
    %v723 = vadd.s32 %v722, 536870912
    %v724 = vshrl.u32 %v723, 30
    %v725 = vshll.u32 %v724, 30
    %v726 = vsub.s32 %v722, %v725
    %vm727 = vcmp.lt.s32.totalorder %v726, 0
    %v728 = vsub.s32 0, %v726
    %v729 = vsel %vm727, %v728, %v726
    %v730 = vclz %v729
    %v731 = vsub.s32 %v730, 2
    %vm732 = vcmp.gt.s32.totalorder 0, %v731
    %v733 = vsel %vm732, 0, %v731
    %v734 = vsub.s32 32, %v733
    %v735 = vshll.u32 %v726, %v733
    %v736 = vshrl.u32 %v718, %v734
    %v737 = vor.u32 %v735, %v736
    %v738 = vsub.s32 4294967266, %v733
    %v739 = vadd.s32 %v738, 127
    %v740 = vshll.u32 %v739, 23
    %v741 = vor.u32 4788187, %v740
    %v742 = vand.u32 2147483647, %v741
    %v744 = vcvt.s32.f32 %v737
    %v745 = vmul.f32 %v744, %v742
    %v746 = vxor.u32 %v745, 2147483648
    %v747 = vsel %vm664, %v746, %v745
    %v748 = vsub.s32 4, %v724
    %v749 = vsel %vm664, %v748, %v724
    %v750 = vsel %vm663, %v36, %v747
    %v751 = vsel %vm663, 0, %v749
    %v752 = vcosq.f32.pop %v750
    %v753 = vsinq.f32.pop %v750
    %vm754 = vweird.f32 %v36
    %v755 = vadd.s32 %v751, 3
    %v756 = vand.u32 %v755, 3
    %vm757 = vcmp.lt.s32.totalorder %v756, 2
    %vm758 = vcmp.eq.s32.totalorder %v756, 0
    %v759 = vxor.u32 %v753, 2147483648
    %v760 = vsel %vm758, %v752, %v759
    %vm761 = vcmp.eq.s32.totalorder %v756, 2
    %v762 = vxor.u32 %v752, 2147483648
    %v763 = vsel %vm761, %v762, %v753
    %v764 = vsel %vm757, %v760, %v763
    %v765 = vsel %vm754, nan, %v764
    %v766 = vand.u32 2147483647, %v37
    %vm767 = vcmp.le.f32.partialorder %v766, 0.7853982
    %vm768 = vcmp.lt.s32.totalorder %v37, 0
    %v769 = vand.u32 %v37, 2139095040
    %v770 = vshrl.u32 %v769, 23
    %v771 = vsub.s32 %v770, 127
    %v772 = vand.u32 2147483647, %v37
    %v773 = vand.u32 %v772, 8388607
    %v774 = vor.u32 %v773, 8388608
    %v775 = vsub.s32 0, %v774
    %v776 = vadd.s32 %v771, 1
    %vm777 = vcmp.gt.s32.totalorder %v776, 0
    %v778 = vsel %vm777, %v776, 0
    %v779 = vshrl.u32 %v778, 5
    %v780 = vand.u32 %v778, 31
    %v781 = vsub.s32 32, %v780
    %v782 = vshrl.u32 683565275, %v781
    %v783 = vshll.u32 683565275, %v780
    %v784 = vshrl.u32 2475754826, %v781
    %v785 = vor.u32 %v783, %v784
    %v786 = vshll.u32 2475754826, %v780
    %v787 = vshrl.u32 2131351028, %v781
    %v788 = vor.u32 %v786, %v787
    %v789 = vshll.u32 2131351028, %v780
    %v790 = vshrl.u32 2102212464, %v781
    %v791 = vor.u32 %v789, %v790
    %v792 = vshll.u32 2102212464, %v780
    %v793 = vshrl.u32 920167782, %v781
    %v794 = vor.u32 %v792, %v793
    %v795 = vshll.u32 920167782, %v780
    %v796 = vshrl.u32 1326507024, %v781
    %v797 = vor.u32 %v795, %v796
    %vm798 = vcmp.lt.s32.totalorder %v779, 1
    %vm799 = vcmp.lt.s32.totalorder %v779, 2
    %vm800 = vcmp.lt.s32.totalorder %v779, 3
    %vm801 = vcmp.lt.s32.totalorder %v779, 4
    %v802 = vsel %vm798, %v782, %v785
    %v803 = vsel %vm801, %v791, 2102212464
    %v804 = vsel %vm800, %v788, %v803
    %v805 = vsel %vm799, %v802, %v804
    %v806 = vsel %vm798, %v785, %v788
    %v807 = vsel %vm801, %v794, 920167782
    %v808 = vsel %vm800, %v791, %v807
    %v809 = vsel %vm799, %v806, %v808
    %v810 = vsel %vm798, %v788, %v791
    %v811 = vsel %vm801, %v797, 1326507024
    %v812 = vsel %vm800, %v794, %v811
    %v813 = vsel %vm799, %v810, %v812
    %v814 = vshll.u32 %v774, 8
    %v815 = vmul.u32.u64.compose %v814, %v813
    %v816 = vextract.low.u32 %v815
    %v817 = vextract.high.u32 %v815
    %v818 = vmul.u32.u64.compose %v814, %v809
    %v819 = vextract.low.u32 %v818
    %v820 = vextract.high.u32 %v818
    %v821 = vmul.u32 %v814, %v805
    %v822 = vadd.s32 %v817, %v819
    %vm823 = vc.u32 %v817, %v819
    %v824 = vadd.s32 %v820, 1
    %v825 = vsel %vm823, %v824, %v820
    %v826 = vadd.s32 %v821, %v825
    %v827 = vadd.s32 %v826, 536870912
    %v828 = vshrl.u32 %v827, 30
    %v829 = vshll.u32 %v828, 30
    %v830 = vsub.s32 %v826, %v829
    %vm831 = vcmp.lt.s32.totalorder %v830, 0
    %v832 = vsub.s32 0, %v830
    %v833 = vsel %vm831, %v832, %v830
    %v834 = vclz %v833
    %v835 = vsub.s32 %v834, 2
    %vm836 = vcmp.gt.s32.totalorder 0, %v835
    %v837 = vsel %vm836, 0, %v835
    %v838 = vsub.s32 32, %v837
    %v839 = vshll.u32 %v830, %v837
    %v840 = vshrl.u32 %v822, %v838
    %v841 = vor.u32 %v839, %v840
    %v842 = vsub.s32 4294967266, %v837
    %v843 = vadd.s32 %v842, 127
    %v844 = vshll.u32 %v843, 23
    %v845 = vor.u32 4788187, %v844
    %v846 = vand.u32 2147483647, %v845
    %v848 = vcvt.s32.f32 %v841
    %v849 = vmul.f32 %v848, %v846
    %v850 = vxor.u32 %v849, 2147483648
    %v851 = vsel %vm768, %v850, %v849
    %v852 = vsub.s32 4, %v828
    %v853 = vsel %vm768, %v852, %v828
    %v854 = vsel %vm767, %v37, %v851
    %v855 = vsel %vm767, 0, %v853
    %v856 = vcosq.f32.pop %v854
    %v857 = vsinq.f32.pop %v854
    %vm858 = vweird.f32 %v37
    %v859 = vadd.s32 %v855, 3
    %v860 = vand.u32 %v859, 3
    %vm861 = vcmp.lt.s32.totalorder %v860, 2
    %vm862 = vcmp.eq.s32.totalorder %v860, 0
    %v863 = vxor.u32 %v857, 2147483648
    %v864 = vsel %vm862, %v856, %v863
    %vm865 = vcmp.eq.s32.totalorder %v860, 2
    %v866 = vxor.u32 %v856, 2147483648
    %v867 = vsel %vm865, %v866, %v857
    %v868 = vsel %vm861, %v864, %v867
    %v869 = vsel %vm858, nan, %v868
    %v870 = vand.u32 2147483647, %v30
    %vm871 = vcmp.le.f32.partialorder %v870, 0.7853982
    %vm872 = vcmp.lt.s32.totalorder %v30, 0
    %v873 = vand.u32 %v30, 2139095040
    %v874 = vshrl.u32 %v873, 23
    %v875 = vsub.s32 %v874, 127
    %v876 = vand.u32 2147483647, %v30
    %v877 = vand.u32 %v876, 8388607
    %v878 = vor.u32 %v877, 8388608
    %v879 = vsub.s32 0, %v878
    %v880 = vadd.s32 %v875, 1
    %vm881 = vcmp.gt.s32.totalorder %v880, 0
    %v882 = vsel %vm881, %v880, 0
    %v883 = vshrl.u32 %v882, 5
    %v884 = vand.u32 %v882, 31
    %v885 = vsub.s32 32, %v884
    %v886 = vshrl.u32 683565275, %v885
    %v887 = vshll.u32 683565275, %v884
    %v888 = vshrl.u32 2475754826, %v885
    %v889 = vor.u32 %v887, %v888
    %v890 = vshll.u32 2475754826, %v884
    %v891 = vshrl.u32 2131351028, %v885
    %v892 = vor.u32 %v890, %v891
    %v893 = vshll.u32 2131351028, %v884
    %v894 = vshrl.u32 2102212464, %v885
    %v895 = vor.u32 %v893, %v894
    %v896 = vshll.u32 2102212464, %v884
    %v897 = vshrl.u32 920167782, %v885
    %v898 = vor.u32 %v896, %v897
    %v899 = vshll.u32 920167782, %v884
    %v900 = vshrl.u32 1326507024, %v885
    %v901 = vor.u32 %v899, %v900
    %vm902 = vcmp.lt.s32.totalorder %v883, 1
    %vm903 = vcmp.lt.s32.totalorder %v883, 2
    %vm904 = vcmp.lt.s32.totalorder %v883, 3
    %vm905 = vcmp.lt.s32.totalorder %v883, 4
    %v906 = vsel %vm902, %v886, %v889
    %v907 = vsel %vm905, %v895, 2102212464
    %v908 = vsel %vm904, %v892, %v907
    %v909 = vsel %vm903, %v906, %v908
    %v910 = vsel %vm902, %v889, %v892
    %v911 = vsel %vm905, %v898, 920167782
    %v912 = vsel %vm904, %v895, %v911
    %v913 = vsel %vm903, %v910, %v912
    %v914 = vsel %vm902, %v892, %v895
    %v915 = vsel %vm905, %v901, 1326507024
    %v916 = vsel %vm904, %v898, %v915
    %v917 = vsel %vm903, %v914, %v916
    %v918 = vshll.u32 %v878, 8
    %v919 = vmul.u32.u64.compose %v918, %v917
    %v920 = vextract.low.u32 %v919
    %v921 = vextract.high.u32 %v919
    %v922 = vmul.u32.u64.compose %v918, %v913
    %v923 = vextract.low.u32 %v922
    %v924 = vextract.high.u32 %v922
    %v925 = vmul.u32 %v918, %v909
    %v926 = vadd.s32 %v921, %v923
    %vm927 = vc.u32 %v921, %v923
    %v928 = vadd.s32 %v924, 1
    %v929 = vsel %vm927, %v928, %v924
    %v930 = vadd.s32 %v925, %v929
    %v931 = vadd.s32 %v930, 536870912
    %v932 = vshrl.u32 %v931, 30
    %v933 = vshll.u32 %v932, 30
    %v934 = vsub.s32 %v930, %v933
    %vm935 = vcmp.lt.s32.totalorder %v934, 0
    %v936 = vsub.s32 0, %v934
    %v937 = vsel %vm935, %v936, %v934
    %v938 = vclz %v937
    %v939 = vsub.s32 %v938, 2
    %vm940 = vcmp.gt.s32.totalorder 0, %v939
    %v941 = vsel %vm940, 0, %v939
    %v942 = vsub.s32 32, %v941
    %v943 = vshll.u32 %v934, %v941
    %v944 = vshrl.u32 %v926, %v942
    %v945 = vor.u32 %v943, %v944
    %v946 = vsub.s32 4294967266, %v941
    %v947 = vadd.s32 %v946, 127
    %v948 = vshll.u32 %v947, 23
    %v949 = vor.u32 4788187, %v948
    %v950 = vand.u32 2147483647, %v949
    %v952 = vcvt.s32.f32 %v945
    %v953 = vmul.f32 %v952, %v950
    %v954 = vxor.u32 %v953, 2147483648
    %v955 = vsel %vm872, %v954, %v953
    %v956 = vsub.s32 4, %v932
    %v957 = vsel %vm872, %v956, %v932
    %v958 = vsel %vm871, %v30, %v955
    %v959 = vsel %vm871, 0, %v957
    %v960 = vcosq.f32.pop %v958
    %v961 = vsinq.f32.pop %v958
    %vm962 = vweird.f32 %v30
    %v963 = vand.u32 %v959, 3
    %vm964 = vcmp.lt.s32.totalorder %v963, 2
    %vm965 = vcmp.eq.s32.totalorder %v963, 0
    %v966 = vxor.u32 %v961, 2147483648
    %v967 = vsel %vm965, %v960, %v966
    %vm968 = vcmp.eq.s32.totalorder %v963, 2
    %v969 = vxor.u32 %v960, 2147483648
    %v970 = vsel %vm968, %v969, %v961
    %v971 = vsel %vm964, %v967, %v970
    %v972 = vsel %vm962, nan, %v971
    %v973 = vand.u32 2147483647, %v31
    %vm974 = vcmp.le.f32.partialorder %v973, 0.7853982
    %vm975 = vcmp.lt.s32.totalorder %v31, 0
    %v976 = vand.u32 %v31, 2139095040
    %v977 = vshrl.u32 %v976, 23
    %v978 = vsub.s32 %v977, 127
    %v979 = vand.u32 2147483647, %v31
    %v980 = vand.u32 %v979, 8388607
    %v981 = vor.u32 %v980, 8388608
    %v982 = vsub.s32 0, %v981
    %v983 = vadd.s32 %v978, 1
    %vm984 = vcmp.gt.s32.totalorder %v983, 0
    %v985 = vsel %vm984, %v983, 0
    %v986 = vshrl.u32 %v985, 5
    %v987 = vand.u32 %v985, 31
    %v988 = vsub.s32 32, %v987
    %v989 = vshrl.u32 683565275, %v988
    %v990 = vshll.u32 683565275, %v987
    %v991 = vshrl.u32 2475754826, %v988
    %v992 = vor.u32 %v990, %v991
    %v993 = vshll.u32 2475754826, %v987
    %v994 = vshrl.u32 2131351028, %v988
    %v995 = vor.u32 %v993, %v994
    %v996 = vshll.u32 2131351028, %v987
    %v997 = vshrl.u32 2102212464, %v988
    %v998 = vor.u32 %v996, %v997
    %v999 = vshll.u32 2102212464, %v987
    %v1000 = vshrl.u32 920167782, %v988
    %v1001 = vor.u32 %v999, %v1000
    %v1002 = vshll.u32 920167782, %v987
    %v1003 = vshrl.u32 1326507024, %v988
    %v1004 = vor.u32 %v1002, %v1003
    %vm1005 = vcmp.lt.s32.totalorder %v986, 1
    %vm1006 = vcmp.lt.s32.totalorder %v986, 2
    %vm1007 = vcmp.lt.s32.totalorder %v986, 3
    %vm1008 = vcmp.lt.s32.totalorder %v986, 4
    %v1009 = vsel %vm1005, %v989, %v992
    %v1010 = vsel %vm1008, %v998, 2102212464
    %v1011 = vsel %vm1007, %v995, %v1010
    %v1012 = vsel %vm1006, %v1009, %v1011
    %v1013 = vsel %vm1005, %v992, %v995
    %v1014 = vsel %vm1008, %v1001, 920167782
    %v1015 = vsel %vm1007, %v998, %v1014
    %v1016 = vsel %vm1006, %v1013, %v1015
    %v1017 = vsel %vm1005, %v995, %v998
    %v1018 = vsel %vm1008, %v1004, 1326507024
    %v1019 = vsel %vm1007, %v1001, %v1018
    %v1020 = vsel %vm1006, %v1017, %v1019
    %v1021 = vshll.u32 %v981, 8
    %v1022 = vmul.u32.u64.compose %v1021, %v1020
    %v1023 = vextract.low.u32 %v1022
    %v1024 = vextract.high.u32 %v1022
    %v1025 = vmul.u32.u64.compose %v1021, %v1016
    %v1026 = vextract.low.u32 %v1025
    %v1027 = vextract.high.u32 %v1025
    %v1028 = vmul.u32 %v1021, %v1012
    %v1029 = vadd.s32 %v1024, %v1026
    %vm1030 = vc.u32 %v1024, %v1026
    %v1031 = vadd.s32 %v1027, 1
    %v1032 = vsel %vm1030, %v1031, %v1027
    %v1033 = vadd.s32 %v1028, %v1032
    %v1034 = vadd.s32 %v1033, 536870912
    %v1035 = vshrl.u32 %v1034, 30
    %v1036 = vshll.u32 %v1035, 30
    %v1037 = vsub.s32 %v1033, %v1036
    %vm1038 = vcmp.lt.s32.totalorder %v1037, 0
    %v1039 = vsub.s32 0, %v1037
    %v1040 = vsel %vm1038, %v1039, %v1037
    %v1041 = vclz %v1040
    %v1042 = vsub.s32 %v1041, 2
    %vm1043 = vcmp.gt.s32.totalorder 0, %v1042
    %v1044 = vsel %vm1043, 0, %v1042
    %v1045 = vsub.s32 32, %v1044
    %v1046 = vshll.u32 %v1037, %v1044
    %v1047 = vshrl.u32 %v1029, %v1045
    %v1048 = vor.u32 %v1046, %v1047
    %v1049 = vsub.s32 4294967266, %v1044
    %v1050 = vadd.s32 %v1049, 127
    %v1051 = vshll.u32 %v1050, 23
    %v1052 = vor.u32 4788187, %v1051
    %v1053 = vand.u32 2147483647, %v1052
    %v1055 = vcvt.s32.f32 %v1048
    %v1056 = vmul.f32 %v1055, %v1053
    %v1057 = vxor.u32 %v1056, 2147483648
    %v1058 = vsel %vm975, %v1057, %v1056
    %v1059 = vsub.s32 4, %v1035
    %v1060 = vsel %vm975, %v1059, %v1035
    %v1061 = vsel %vm974, %v31, %v1058
    %v1062 = vsel %vm974, 0, %v1060
    %v1063 = vcosq.f32.pop %v1061
    %v1064 = vsinq.f32.pop %v1061
    %vm1065 = vweird.f32 %v31
    %v1066 = vand.u32 %v1062, 3
    %vm1067 = vcmp.lt.s32.totalorder %v1066, 2
    %vm1068 = vcmp.eq.s32.totalorder %v1066, 0
    %v1069 = vxor.u32 %v1064, 2147483648
    %v1070 = vsel %vm1068, %v1063, %v1069
    %vm1071 = vcmp.eq.s32.totalorder %v1066, 2
    %v1072 = vxor.u32 %v1063, 2147483648
    %v1073 = vsel %vm1071, %v1072, %v1064
    %v1074 = vsel %vm1067, %v1070, %v1073
    %v1075 = vsel %vm1065, nan, %v1074
    %v1076 = vand.u32 2147483647, %v32
    %vm1077 = vcmp.le.f32.partialorder %v1076, 0.7853982
    %vm1078 = vcmp.lt.s32.totalorder %v32, 0
    %v1079 = vand.u32 %v32, 2139095040
    %v1080 = vshrl.u32 %v1079, 23
    %v1081 = vsub.s32 %v1080, 127
    %v1082 = vand.u32 2147483647, %v32
    %v1083 = vand.u32 %v1082, 8388607
    %v1084 = vor.u32 %v1083, 8388608
    %v1085 = vsub.s32 0, %v1084
    %v1086 = vadd.s32 %v1081, 1
    %vm1087 = vcmp.gt.s32.totalorder %v1086, 0
    %v1088 = vsel %vm1087, %v1086, 0
    %v1089 = vshrl.u32 %v1088, 5
    %v1090 = vand.u32 %v1088, 31
    %v1091 = vsub.s32 32, %v1090
    %v1092 = vshrl.u32 683565275, %v1091
    %v1093 = vshll.u32 683565275, %v1090
    %v1094 = vshrl.u32 2475754826, %v1091
    %v1095 = vor.u32 %v1093, %v1094
    %v1096 = vshll.u32 2475754826, %v1090
    %v1097 = vshrl.u32 2131351028, %v1091
    %v1098 = vor.u32 %v1096, %v1097
    %v1099 = vshll.u32 2131351028, %v1090
    %v1100 = vshrl.u32 2102212464, %v1091
    %v1101 = vor.u32 %v1099, %v1100
    %v1102 = vshll.u32 2102212464, %v1090
    %v1103 = vshrl.u32 920167782, %v1091
    %v1104 = vor.u32 %v1102, %v1103
    %v1105 = vshll.u32 920167782, %v1090
    %v1106 = vshrl.u32 1326507024, %v1091
    %v1107 = vor.u32 %v1105, %v1106
    %vm1108 = vcmp.lt.s32.totalorder %v1089, 1
    %vm1109 = vcmp.lt.s32.totalorder %v1089, 2
    %vm1110 = vcmp.lt.s32.totalorder %v1089, 3
    %vm1111 = vcmp.lt.s32.totalorder %v1089, 4
    %v1112 = vsel %vm1108, %v1092, %v1095
    %v1113 = vsel %vm1111, %v1101, 2102212464
    %v1114 = vsel %vm1110, %v1098, %v1113
    %v1115 = vsel %vm1109, %v1112, %v1114
    %v1116 = vsel %vm1108, %v1095, %v1098
    %v1117 = vsel %vm1111, %v1104, 920167782
    %v1118 = vsel %vm1110, %v1101, %v1117
    %v1119 = vsel %vm1109, %v1116, %v1118
    %v1120 = vsel %vm1108, %v1098, %v1101
    %v1121 = vsel %vm1111, %v1107, 1326507024
    %v1122 = vsel %vm1110, %v1104, %v1121
    %v1123 = vsel %vm1109, %v1120, %v1122
    %v1124 = vshll.u32 %v1084, 8
    %v1125 = vmul.u32.u64.compose %v1124, %v1123
    %v1126 = vextract.low.u32 %v1125
    %v1127 = vextract.high.u32 %v1125
    %v1128 = vmul.u32.u64.compose %v1124, %v1119
    %v1129 = vextract.low.u32 %v1128
    %v1130 = vextract.high.u32 %v1128
    %v1131 = vmul.u32 %v1124, %v1115
    %v1132 = vadd.s32 %v1127, %v1129
    %vm1133 = vc.u32 %v1127, %v1129
    %v1134 = vadd.s32 %v1130, 1
    %v1135 = vsel %vm1133, %v1134, %v1130
    %v1136 = vadd.s32 %v1131, %v1135
    %v1137 = vadd.s32 %v1136, 536870912
    %v1138 = vshrl.u32 %v1137, 30
    %v1139 = vshll.u32 %v1138, 30
    %v1140 = vsub.s32 %v1136, %v1139
    %vm1141 = vcmp.lt.s32.totalorder %v1140, 0
    %v1142 = vsub.s32 0, %v1140
    %v1143 = vsel %vm1141, %v1142, %v1140
    %v1144 = vclz %v1143
    %v1145 = vsub.s32 %v1144, 2
    %vm1146 = vcmp.gt.s32.totalorder 0, %v1145
    %v1147 = vsel %vm1146, 0, %v1145
    %v1148 = vsub.s32 32, %v1147
    %v1149 = vshll.u32 %v1140, %v1147
    %v1150 = vshrl.u32 %v1132, %v1148
    %v1151 = vor.u32 %v1149, %v1150
    %v1152 = vsub.s32 4294967266, %v1147
    %v1153 = vadd.s32 %v1152, 127
    %v1154 = vshll.u32 %v1153, 23
    %v1155 = vor.u32 4788187, %v1154
    %v1156 = vand.u32 2147483647, %v1155
    %v1158 = vcvt.s32.f32 %v1151
    %v1159 = vmul.f32 %v1158, %v1156
    %v1160 = vxor.u32 %v1159, 2147483648
    %v1161 = vsel %vm1078, %v1160, %v1159
    %v1162 = vsub.s32 4, %v1138
    %v1163 = vsel %vm1078, %v1162, %v1138
    %v1164 = vsel %vm1077, %v32, %v1161
    %v1165 = vsel %vm1077, 0, %v1163
    %v1166 = vcosq.f32.pop %v1164
    %v1167 = vsinq.f32.pop %v1164
    %vm1168 = vweird.f32 %v32
    %v1169 = vand.u32 %v1165, 3
    %vm1170 = vcmp.lt.s32.totalorder %v1169, 2
    %vm1171 = vcmp.eq.s32.totalorder %v1169, 0
    %v1172 = vxor.u32 %v1167, 2147483648
    %v1173 = vsel %vm1171, %v1166, %v1172
    %vm1174 = vcmp.eq.s32.totalorder %v1169, 2
    %v1175 = vxor.u32 %v1166, 2147483648
    %v1176 = vsel %vm1174, %v1175, %v1167
    %v1177 = vsel %vm1170, %v1173, %v1176
    %v1178 = vsel %vm1168, nan, %v1177
    %v1179 = vand.u32 2147483647, %v33
    %vm1180 = vcmp.le.f32.partialorder %v1179, 0.7853982
    %vm1181 = vcmp.lt.s32.totalorder %v33, 0
    %v1182 = vand.u32 %v33, 2139095040
    %v1183 = vshrl.u32 %v1182, 23
    %v1184 = vsub.s32 %v1183, 127
    %v1185 = vand.u32 2147483647, %v33
    %v1186 = vand.u32 %v1185, 8388607
    %v1187 = vor.u32 %v1186, 8388608
    %v1188 = vsub.s32 0, %v1187
    %v1189 = vadd.s32 %v1184, 1
    %vm1190 = vcmp.gt.s32.totalorder %v1189, 0
    %v1191 = vsel %vm1190, %v1189, 0
    %v1192 = vshrl.u32 %v1191, 5
    %v1193 = vand.u32 %v1191, 31
    %v1194 = vsub.s32 32, %v1193
    %v1195 = vshrl.u32 683565275, %v1194
    %v1196 = vshll.u32 683565275, %v1193
    %v1197 = vshrl.u32 2475754826, %v1194
    %v1198 = vor.u32 %v1196, %v1197
    %v1199 = vshll.u32 2475754826, %v1193
    %v1200 = vshrl.u32 2131351028, %v1194
    %v1201 = vor.u32 %v1199, %v1200
    %v1202 = vshll.u32 2131351028, %v1193
    %v1203 = vshrl.u32 2102212464, %v1194
    %v1204 = vor.u32 %v1202, %v1203
    %v1205 = vshll.u32 2102212464, %v1193
    %v1206 = vshrl.u32 920167782, %v1194
    %v1207 = vor.u32 %v1205, %v1206
    %v1208 = vshll.u32 920167782, %v1193
    %v1209 = vshrl.u32 1326507024, %v1194
    %v1210 = vor.u32 %v1208, %v1209
    %vm1211 = vcmp.lt.s32.totalorder %v1192, 1
    %vm1212 = vcmp.lt.s32.totalorder %v1192, 2
    %vm1213 = vcmp.lt.s32.totalorder %v1192, 3
    %vm1214 = vcmp.lt.s32.totalorder %v1192, 4
    %v1215 = vsel %vm1211, %v1195, %v1198
    %v1216 = vsel %vm1214, %v1204, 2102212464
    %v1217 = vsel %vm1213, %v1201, %v1216
    %v1218 = vsel %vm1212, %v1215, %v1217
    %v1219 = vsel %vm1211, %v1198, %v1201
    %v1220 = vsel %vm1214, %v1207, 920167782
    %v1221 = vsel %vm1213, %v1204, %v1220
    %v1222 = vsel %vm1212, %v1219, %v1221
    %v1223 = vsel %vm1211, %v1201, %v1204
    %v1224 = vsel %vm1214, %v1210, 1326507024
    %v1225 = vsel %vm1213, %v1207, %v1224
    %v1226 = vsel %vm1212, %v1223, %v1225
    %v1227 = vshll.u32 %v1187, 8
    %v1228 = vmul.u32.u64.compose %v1227, %v1226
    %v1229 = vextract.low.u32 %v1228
    %v1230 = vextract.high.u32 %v1228
    %v1231 = vmul.u32.u64.compose %v1227, %v1222
    %v1232 = vextract.low.u32 %v1231
    %v1233 = vextract.high.u32 %v1231
    %v1234 = vmul.u32 %v1227, %v1218
    %v1235 = vadd.s32 %v1230, %v1232
    %vm1236 = vc.u32 %v1230, %v1232
    %v1237 = vadd.s32 %v1233, 1
    %v1238 = vsel %vm1236, %v1237, %v1233
    %v1239 = vadd.s32 %v1234, %v1238
    %v1240 = vadd.s32 %v1239, 536870912
    %v1241 = vshrl.u32 %v1240, 30
    %v1242 = vshll.u32 %v1241, 30
    %v1243 = vsub.s32 %v1239, %v1242
    %vm1244 = vcmp.lt.s32.totalorder %v1243, 0
    %v1245 = vsub.s32 0, %v1243
    %v1246 = vsel %vm1244, %v1245, %v1243
    %v1247 = vclz %v1246
    %v1248 = vsub.s32 %v1247, 2
    %vm1249 = vcmp.gt.s32.totalorder 0, %v1248
    %v1250 = vsel %vm1249, 0, %v1248
    %v1251 = vsub.s32 32, %v1250
    %v1252 = vshll.u32 %v1243, %v1250
    %v1253 = vshrl.u32 %v1235, %v1251
    %v1254 = vor.u32 %v1252, %v1253
    %v1255 = vsub.s32 4294967266, %v1250
    %v1256 = vadd.s32 %v1255, 127
    %v1257 = vshll.u32 %v1256, 23
    %v1258 = vor.u32 4788187, %v1257
    %v1259 = vand.u32 2147483647, %v1258
    %v1261 = vcvt.s32.f32 %v1254
    %v1262 = vmul.f32 %v1261, %v1259
    %v1263 = vxor.u32 %v1262, 2147483648
    %v1264 = vsel %vm1181, %v1263, %v1262
    %v1265 = vsub.s32 4, %v1241
    %v1266 = vsel %vm1181, %v1265, %v1241
    %v1267 = vsel %vm1180, %v33, %v1264
    %v1268 = vsel %vm1180, 0, %v1266
    %v1269 = vcosq.f32.pop %v1267
    %v1270 = vsinq.f32.pop %v1267
    %vm1271 = vweird.f32 %v33
    %v1272 = vand.u32 %v1268, 3
    %vm1273 = vcmp.lt.s32.totalorder %v1272, 2
    %vm1274 = vcmp.eq.s32.totalorder %v1272, 0
    %v1275 = vxor.u32 %v1270, 2147483648
    %v1276 = vsel %vm1274, %v1269, %v1275
    %vm1277 = vcmp.eq.s32.totalorder %v1272, 2
    %v1278 = vxor.u32 %v1269, 2147483648
    %v1279 = vsel %vm1277, %v1278, %v1270
    %v1280 = vsel %vm1273, %v1276, %v1279
    %v1281 = vsel %vm1271, nan, %v1280
    %v1282 = vand.u32 2147483647, %v34
    %vm1283 = vcmp.le.f32.partialorder %v1282, 0.7853982
    %vm1284 = vcmp.lt.s32.totalorder %v34, 0
    %v1285 = vand.u32 %v34, 2139095040
    %v1286 = vshrl.u32 %v1285, 23
    %v1287 = vsub.s32 %v1286, 127
    %v1288 = vand.u32 2147483647, %v34
    %v1289 = vand.u32 %v1288, 8388607
    %v1290 = vor.u32 %v1289, 8388608
    %v1291 = vsub.s32 0, %v1290
    %v1292 = vadd.s32 %v1287, 1
    %vm1293 = vcmp.gt.s32.totalorder %v1292, 0
    %v1294 = vsel %vm1293, %v1292, 0
    %v1295 = vshrl.u32 %v1294, 5
    %v1296 = vand.u32 %v1294, 31
    %v1297 = vsub.s32 32, %v1296
    %v1298 = vshrl.u32 683565275, %v1297
    %v1299 = vshll.u32 683565275, %v1296
    %v1300 = vshrl.u32 2475754826, %v1297
    %v1301 = vor.u32 %v1299, %v1300
    %v1302 = vshll.u32 2475754826, %v1296
    %v1303 = vshrl.u32 2131351028, %v1297
    %v1304 = vor.u32 %v1302, %v1303
    %v1305 = vshll.u32 2131351028, %v1296
    %v1306 = vshrl.u32 2102212464, %v1297
    %v1307 = vor.u32 %v1305, %v1306
    %v1308 = vshll.u32 2102212464, %v1296
    %v1309 = vshrl.u32 920167782, %v1297
    %v1310 = vor.u32 %v1308, %v1309
    %v1311 = vshll.u32 920167782, %v1296
    %v1312 = vshrl.u32 1326507024, %v1297
    %v1313 = vor.u32 %v1311, %v1312
    %vm1314 = vcmp.lt.s32.totalorder %v1295, 1
    %vm1315 = vcmp.lt.s32.totalorder %v1295, 2
    %vm1316 = vcmp.lt.s32.totalorder %v1295, 3
    %vm1317 = vcmp.lt.s32.totalorder %v1295, 4
    %v1318 = vsel %vm1314, %v1298, %v1301
    %v1319 = vsel %vm1317, %v1307, 2102212464
    %v1320 = vsel %vm1316, %v1304, %v1319
    %v1321 = vsel %vm1315, %v1318, %v1320
    %v1322 = vsel %vm1314, %v1301, %v1304
    %v1323 = vsel %vm1317, %v1310, 920167782
    %v1324 = vsel %vm1316, %v1307, %v1323
    %v1325 = vsel %vm1315, %v1322, %v1324
    %v1326 = vsel %vm1314, %v1304, %v1307
    %v1327 = vsel %vm1317, %v1313, 1326507024
    %v1328 = vsel %vm1316, %v1310, %v1327
    %v1329 = vsel %vm1315, %v1326, %v1328
    %v1330 = vshll.u32 %v1290, 8
    %v1331 = vmul.u32.u64.compose %v1330, %v1329
    %v1332 = vextract.low.u32 %v1331
    %v1333 = vextract.high.u32 %v1331
    %v1334 = vmul.u32.u64.compose %v1330, %v1325
    %v1335 = vextract.low.u32 %v1334
    %v1336 = vextract.high.u32 %v1334
    %v1337 = vmul.u32 %v1330, %v1321
    %v1338 = vadd.s32 %v1333, %v1335
    %vm1339 = vc.u32 %v1333, %v1335
    %v1340 = vadd.s32 %v1336, 1
    %v1341 = vsel %vm1339, %v1340, %v1336
    %v1342 = vadd.s32 %v1337, %v1341
    %v1343 = vadd.s32 %v1342, 536870912
    %v1344 = vshrl.u32 %v1343, 30
    %v1345 = vshll.u32 %v1344, 30
    %v1346 = vsub.s32 %v1342, %v1345
    %vm1347 = vcmp.lt.s32.totalorder %v1346, 0
    %v1348 = vsub.s32 0, %v1346
    %v1349 = vsel %vm1347, %v1348, %v1346
    %v1350 = vclz %v1349
    %v1351 = vsub.s32 %v1350, 2
    %vm1352 = vcmp.gt.s32.totalorder 0, %v1351
    %v1353 = vsel %vm1352, 0, %v1351
    %v1354 = vsub.s32 32, %v1353
    %v1355 = vshll.u32 %v1346, %v1353
    %v1356 = vshrl.u32 %v1338, %v1354
    %v1357 = vor.u32 %v1355, %v1356
    %v1358 = vsub.s32 4294967266, %v1353
    %v1359 = vadd.s32 %v1358, 127
    %v1360 = vshll.u32 %v1359, 23
    %v1361 = vor.u32 4788187, %v1360
    %v1362 = vand.u32 2147483647, %v1361
    %v1364 = vcvt.s32.f32 %v1357
    %v1365 = vmul.f32 %v1364, %v1362
    %v1366 = vxor.u32 %v1365, 2147483648
    %v1367 = vsel %vm1284, %v1366, %v1365
    %v1368 = vsub.s32 4, %v1344
    %v1369 = vsel %vm1284, %v1368, %v1344
    %v1370 = vsel %vm1283, %v34, %v1367
    %v1371 = vsel %vm1283, 0, %v1369
    %v1372 = vcosq.f32.pop %v1370
    %v1373 = vsinq.f32.pop %v1370
    %vm1374 = vweird.f32 %v34
    %v1375 = vand.u32 %v1371, 3
    %vm1376 = vcmp.lt.s32.totalorder %v1375, 2
    %vm1377 = vcmp.eq.s32.totalorder %v1375, 0
    %v1378 = vxor.u32 %v1373, 2147483648
    %v1379 = vsel %vm1377, %v1372, %v1378
    %vm1380 = vcmp.eq.s32.totalorder %v1375, 2
    %v1381 = vxor.u32 %v1372, 2147483648
    %v1382 = vsel %vm1380, %v1381, %v1373
    %v1383 = vsel %vm1376, %v1379, %v1382
    %v1384 = vsel %vm1374, nan, %v1383
    %v1385 = vand.u32 2147483647, %v35
    %vm1386 = vcmp.le.f32.partialorder %v1385, 0.7853982
    %vm1387 = vcmp.lt.s32.totalorder %v35, 0
    %v1388 = vand.u32 %v35, 2139095040
    %v1389 = vshrl.u32 %v1388, 23
    %v1390 = vsub.s32 %v1389, 127
    %v1391 = vand.u32 2147483647, %v35
    %v1392 = vand.u32 %v1391, 8388607
    %v1393 = vor.u32 %v1392, 8388608
    %v1394 = vsub.s32 0, %v1393
    %v1395 = vadd.s32 %v1390, 1
    %vm1396 = vcmp.gt.s32.totalorder %v1395, 0
    %v1397 = vsel %vm1396, %v1395, 0
    %v1398 = vshrl.u32 %v1397, 5
    %v1399 = vand.u32 %v1397, 31
    %v1400 = vsub.s32 32, %v1399
    %v1401 = vshrl.u32 683565275, %v1400
    %v1402 = vshll.u32 683565275, %v1399
    %v1403 = vshrl.u32 2475754826, %v1400
    %v1404 = vor.u32 %v1402, %v1403
    %v1405 = vshll.u32 2475754826, %v1399
    %v1406 = vshrl.u32 2131351028, %v1400
    %v1407 = vor.u32 %v1405, %v1406
    %v1408 = vshll.u32 2131351028, %v1399
    %v1409 = vshrl.u32 2102212464, %v1400
    %v1410 = vor.u32 %v1408, %v1409
    %v1411 = vshll.u32 2102212464, %v1399
    %v1412 = vshrl.u32 920167782, %v1400
    %v1413 = vor.u32 %v1411, %v1412
    %v1414 = vshll.u32 920167782, %v1399
    %v1415 = vshrl.u32 1326507024, %v1400
    %v1416 = vor.u32 %v1414, %v1415
    %vm1417 = vcmp.lt.s32.totalorder %v1398, 1
    %vm1418 = vcmp.lt.s32.totalorder %v1398, 2
    %vm1419 = vcmp.lt.s32.totalorder %v1398, 3
    %vm1420 = vcmp.lt.s32.totalorder %v1398, 4
    %v1421 = vsel %vm1417, %v1401, %v1404
    %v1422 = vsel %vm1420, %v1410, 2102212464
    %v1423 = vsel %vm1419, %v1407, %v1422
    %v1424 = vsel %vm1418, %v1421, %v1423
    %v1425 = vsel %vm1417, %v1404, %v1407
    %v1426 = vsel %vm1420, %v1413, 920167782
    %v1427 = vsel %vm1419, %v1410, %v1426
    %v1428 = vsel %vm1418, %v1425, %v1427
    %v1429 = vsel %vm1417, %v1407, %v1410
    %v1430 = vsel %vm1420, %v1416, 1326507024
    %v1431 = vsel %vm1419, %v1413, %v1430
    %v1432 = vsel %vm1418, %v1429, %v1431
    %v1433 = vshll.u32 %v1393, 8
    %v1434 = vmul.u32.u64.compose %v1433, %v1432
    %v1435 = vextract.low.u32 %v1434
    %v1436 = vextract.high.u32 %v1434
    %v1437 = vmul.u32.u64.compose %v1433, %v1428
    %v1438 = vextract.low.u32 %v1437
    %v1439 = vextract.high.u32 %v1437
    %v1440 = vmul.u32 %v1433, %v1424
    %v1441 = vadd.s32 %v1436, %v1438
    %vm1442 = vc.u32 %v1436, %v1438
    %v1443 = vadd.s32 %v1439, 1
    %v1444 = vsel %vm1442, %v1443, %v1439
    %v1445 = vadd.s32 %v1440, %v1444
    %v1446 = vadd.s32 %v1445, 536870912
    %v1447 = vshrl.u32 %v1446, 30
    %v1448 = vshll.u32 %v1447, 30
    %v1449 = vsub.s32 %v1445, %v1448
    %vm1450 = vcmp.lt.s32.totalorder %v1449, 0
    %v1451 = vsub.s32 0, %v1449
    %v1452 = vsel %vm1450, %v1451, %v1449
    %v1453 = vclz %v1452
    %v1454 = vsub.s32 %v1453, 2
    %vm1455 = vcmp.gt.s32.totalorder 0, %v1454
    %v1456 = vsel %vm1455, 0, %v1454
    %v1457 = vsub.s32 32, %v1456
    %v1458 = vshll.u32 %v1449, %v1456
    %v1459 = vshrl.u32 %v1441, %v1457
    %v1460 = vor.u32 %v1458, %v1459
    %v1461 = vsub.s32 4294967266, %v1456
    %v1462 = vadd.s32 %v1461, 127
    %v1463 = vshll.u32 %v1462, 23
    %v1464 = vor.u32 4788187, %v1463
    %v1465 = vand.u32 2147483647, %v1464
    %v1467 = vcvt.s32.f32 %v1460
    %v1468 = vmul.f32 %v1467, %v1465
    %v1469 = vxor.u32 %v1468, 2147483648
    %v1470 = vsel %vm1387, %v1469, %v1468
    %v1471 = vsub.s32 4, %v1447
    %v1472 = vsel %vm1387, %v1471, %v1447
    %v1473 = vsel %vm1386, %v35, %v1470
    %v1474 = vsel %vm1386, 0, %v1472
    %v1475 = vcosq.f32.pop %v1473
    %v1476 = vsinq.f32.pop %v1473
    %vm1477 = vweird.f32 %v35
    %v1478 = vand.u32 %v1474, 3
    %vm1479 = vcmp.lt.s32.totalorder %v1478, 2
    %vm1480 = vcmp.eq.s32.totalorder %v1478, 0
    %v1481 = vxor.u32 %v1476, 2147483648
    %v1482 = vsel %vm1480, %v1475, %v1481
    %vm1483 = vcmp.eq.s32.totalorder %v1478, 2
    %v1484 = vxor.u32 %v1475, 2147483648
    %v1485 = vsel %vm1483, %v1484, %v1476
    %v1486 = vsel %vm1479, %v1482, %v1485
    %v1487 = vsel %vm1477, nan, %v1486
    %v1488 = vand.u32 2147483647, %v36
    %vm1489 = vcmp.le.f32.partialorder %v1488, 0.7853982
    %vm1490 = vcmp.lt.s32.totalorder %v36, 0
    %v1491 = vand.u32 %v36, 2139095040
    %v1492 = vshrl.u32 %v1491, 23
    %v1493 = vsub.s32 %v1492, 127
    %v1494 = vand.u32 2147483647, %v36
    %v1495 = vand.u32 %v1494, 8388607
    %v1496 = vor.u32 %v1495, 8388608
    %v1497 = vsub.s32 0, %v1496
    %v1498 = vadd.s32 %v1493, 1
    %vm1499 = vcmp.gt.s32.totalorder %v1498, 0
    %v1500 = vsel %vm1499, %v1498, 0
    %v1501 = vshrl.u32 %v1500, 5
    %v1502 = vand.u32 %v1500, 31
    %v1503 = vsub.s32 32, %v1502
    %v1504 = vshrl.u32 683565275, %v1503
    %v1505 = vshll.u32 683565275, %v1502
    %v1506 = vshrl.u32 2475754826, %v1503
    %v1507 = vor.u32 %v1505, %v1506
    %v1508 = vshll.u32 2475754826, %v1502
    %v1509 = vshrl.u32 2131351028, %v1503
    %v1510 = vor.u32 %v1508, %v1509
    %v1511 = vshll.u32 2131351028, %v1502
    %v1512 = vshrl.u32 2102212464, %v1503
    %v1513 = vor.u32 %v1511, %v1512
    %v1514 = vshll.u32 2102212464, %v1502
    %v1515 = vshrl.u32 920167782, %v1503
    %v1516 = vor.u32 %v1514, %v1515
    %v1517 = vshll.u32 920167782, %v1502
    %v1518 = vshrl.u32 1326507024, %v1503
    %v1519 = vor.u32 %v1517, %v1518
    %vm1520 = vcmp.lt.s32.totalorder %v1501, 1
    %vm1521 = vcmp.lt.s32.totalorder %v1501, 2
    %vm1522 = vcmp.lt.s32.totalorder %v1501, 3
    %vm1523 = vcmp.lt.s32.totalorder %v1501, 4
    %v1524 = vsel %vm1520, %v1504, %v1507
    %v1525 = vsel %vm1523, %v1513, 2102212464
    %v1526 = vsel %vm1522, %v1510, %v1525
    %v1527 = vsel %vm1521, %v1524, %v1526
    %v1528 = vsel %vm1520, %v1507, %v1510
    %v1529 = vsel %vm1523, %v1516, 920167782
    %v1530 = vsel %vm1522, %v1513, %v1529
    %v1531 = vsel %vm1521, %v1528, %v1530
    %v1532 = vsel %vm1520, %v1510, %v1513
    %v1533 = vsel %vm1523, %v1519, 1326507024
    %v1534 = vsel %vm1522, %v1516, %v1533
    %v1535 = vsel %vm1521, %v1532, %v1534
    %v1536 = vshll.u32 %v1496, 8
    %v1537 = vmul.u32.u64.compose %v1536, %v1535
    %v1538 = vextract.low.u32 %v1537
    %v1539 = vextract.high.u32 %v1537
    %v1540 = vmul.u32.u64.compose %v1536, %v1531
    %v1541 = vextract.low.u32 %v1540
    %v1542 = vextract.high.u32 %v1540
    %v1543 = vmul.u32 %v1536, %v1527
    %v1544 = vadd.s32 %v1539, %v1541
    %vm1545 = vc.u32 %v1539, %v1541
    %v1546 = vadd.s32 %v1542, 1
    %v1547 = vsel %vm1545, %v1546, %v1542
    %v1548 = vadd.s32 %v1543, %v1547
    %v1549 = vadd.s32 %v1548, 536870912
    %v1550 = vshrl.u32 %v1549, 30
    %v1551 = vshll.u32 %v1550, 30
    %v1552 = vsub.s32 %v1548, %v1551
    %vm1553 = vcmp.lt.s32.totalorder %v1552, 0
    %v1554 = vsub.s32 0, %v1552
    %v1555 = vsel %vm1553, %v1554, %v1552
    %v1556 = vclz %v1555
    %v1557 = vsub.s32 %v1556, 2
    %vm1558 = vcmp.gt.s32.totalorder 0, %v1557
    %v1559 = vsel %vm1558, 0, %v1557
    %v1560 = vsub.s32 32, %v1559
    %v1561 = vshll.u32 %v1552, %v1559
    %v1562 = vshrl.u32 %v1544, %v1560
    %v1563 = vor.u32 %v1561, %v1562
    %v1564 = vsub.s32 4294967266, %v1559
    %v1565 = vadd.s32 %v1564, 127
    %v1566 = vshll.u32 %v1565, 23
    %v1567 = vor.u32 4788187, %v1566
    %v1568 = vand.u32 2147483647, %v1567
    %v1570 = vcvt.s32.f32 %v1563
    %v1571 = vmul.f32 %v1570, %v1568
    %v1572 = vxor.u32 %v1571, 2147483648
    %v1573 = vsel %vm1490, %v1572, %v1571
    %v1574 = vsub.s32 4, %v1550
    %v1575 = vsel %vm1490, %v1574, %v1550
    %v1576 = vsel %vm1489, %v36, %v1573
    %v1577 = vsel %vm1489, 0, %v1575
    %v1578 = vcosq.f32.pop %v1576
    %v1579 = vsinq.f32.pop %v1576
    %vm1580 = vweird.f32 %v36
    %v1581 = vand.u32 %v1577, 3
    %vm1582 = vcmp.lt.s32.totalorder %v1581, 2
    %vm1583 = vcmp.eq.s32.totalorder %v1581, 0
    %v1584 = vxor.u32 %v1579, 2147483648
    %v1585 = vsel %vm1583, %v1578, %v1584
    %vm1586 = vcmp.eq.s32.totalorder %v1581, 2
    %v1587 = vxor.u32 %v1578, 2147483648
    %v1588 = vsel %vm1586, %v1587, %v1579
    %v1589 = vsel %vm1582, %v1585, %v1588
    %v1590 = vsel %vm1580, nan, %v1589
    %v1591 = vand.u32 2147483647, %v37
    %vm1592 = vcmp.le.f32.partialorder %v1591, 0.7853982
    %vm1593 = vcmp.lt.s32.totalorder %v37, 0
    %v1594 = vand.u32 %v37, 2139095040
    %v1595 = vshrl.u32 %v1594, 23
    %v1596 = vsub.s32 %v1595, 127
    %v1597 = vand.u32 2147483647, %v37
    %v1598 = vand.u32 %v1597, 8388607
    %v1599 = vor.u32 %v1598, 8388608
    %v1600 = vsub.s32 0, %v1599
    %v1601 = vadd.s32 %v1596, 1
    %vm1602 = vcmp.gt.s32.totalorder %v1601, 0
    %v1603 = vsel %vm1602, %v1601, 0
    %v1604 = vshrl.u32 %v1603, 5
    %v1605 = vand.u32 %v1603, 31
    %v1606 = vsub.s32 32, %v1605
    %v1607 = vshrl.u32 683565275, %v1606
    %v1608 = vshll.u32 683565275, %v1605
    %v1609 = vshrl.u32 2475754826, %v1606
    %v1610 = vor.u32 %v1608, %v1609
    %v1611 = vshll.u32 2475754826, %v1605
    %v1612 = vshrl.u32 2131351028, %v1606
    %v1613 = vor.u32 %v1611, %v1612
    %v1614 = vshll.u32 2131351028, %v1605
    %v1615 = vshrl.u32 2102212464, %v1606
    %v1616 = vor.u32 %v1614, %v1615
    %v1617 = vshll.u32 2102212464, %v1605
    %v1618 = vshrl.u32 920167782, %v1606
    %v1619 = vor.u32 %v1617, %v1618
    %v1620 = vshll.u32 920167782, %v1605
    %v1621 = vshrl.u32 1326507024, %v1606
    %v1622 = vor.u32 %v1620, %v1621
    %vm1623 = vcmp.lt.s32.totalorder %v1604, 1
    %vm1624 = vcmp.lt.s32.totalorder %v1604, 2
    %vm1625 = vcmp.lt.s32.totalorder %v1604, 3
    %vm1626 = vcmp.lt.s32.totalorder %v1604, 4
    %v1627 = vsel %vm1623, %v1607, %v1610
    %v1628 = vsel %vm1626, %v1616, 2102212464
    %v1629 = vsel %vm1625, %v1613, %v1628
    %v1630 = vsel %vm1624, %v1627, %v1629
    %v1631 = vsel %vm1623, %v1610, %v1613
    %v1632 = vsel %vm1626, %v1619, 920167782
    %v1633 = vsel %vm1625, %v1616, %v1632
    %v1634 = vsel %vm1624, %v1631, %v1633
    %v1635 = vsel %vm1623, %v1613, %v1616
    %v1636 = vsel %vm1626, %v1622, 1326507024
    %v1637 = vsel %vm1625, %v1619, %v1636
    %v1638 = vsel %vm1624, %v1635, %v1637
    %v1639 = vshll.u32 %v1599, 8
    %v1640 = vmul.u32.u64.compose %v1639, %v1638
    %v1641 = vextract.low.u32 %v1640
    %v1642 = vextract.high.u32 %v1640
    %v1643 = vmul.u32.u64.compose %v1639, %v1634
    %v1644 = vextract.low.u32 %v1643
    %v1645 = vextract.high.u32 %v1643
    %v1646 = vmul.u32 %v1639, %v1630
    %v1647 = vadd.s32 %v1642, %v1644
    %vm1648 = vc.u32 %v1642, %v1644
    %v1649 = vadd.s32 %v1645, 1
    %v1650 = vsel %vm1648, %v1649, %v1645
    %v1651 = vadd.s32 %v1646, %v1650
    %v1652 = vadd.s32 %v1651, 536870912
    %v1653 = vshrl.u32 %v1652, 30
    %v1654 = vshll.u32 %v1653, 30
    %v1655 = vsub.s32 %v1651, %v1654
    %vm1656 = vcmp.lt.s32.totalorder %v1655, 0
    %v1657 = vsub.s32 0, %v1655
    %v1658 = vsel %vm1656, %v1657, %v1655
    %v1659 = vclz %v1658
    %v1660 = vsub.s32 %v1659, 2
    %vm1661 = vcmp.gt.s32.totalorder 0, %v1660
    %v1662 = vsel %vm1661, 0, %v1660
    %v1663 = vsub.s32 32, %v1662
    %v1664 = vshll.u32 %v1655, %v1662
    %v1665 = vshrl.u32 %v1647, %v1663
    %v1666 = vor.u32 %v1664, %v1665
    %v1667 = vsub.s32 4294967266, %v1662
    %v1668 = vadd.s32 %v1667, 127
    %v1669 = vshll.u32 %v1668, 23
    %v1670 = vor.u32 4788187, %v1669
    %v1671 = vand.u32 2147483647, %v1670
    %v1673 = vcvt.s32.f32 %v1666
    %v1674 = vmul.f32 %v1673, %v1671
    %v1675 = vxor.u32 %v1674, 2147483648
    %v1676 = vsel %vm1593, %v1675, %v1674
    %v1677 = vsub.s32 4, %v1653
    %v1678 = vsel %vm1593, %v1677, %v1653
    %v1679 = vsel %vm1592, %v37, %v1676
    %v1680 = vsel %vm1592, 0, %v1678
    %v1681 = vcosq.f32.pop %v1679
    %v1682 = vsinq.f32.pop %v1679
    %vm1683 = vweird.f32 %v37
    %v1684 = vand.u32 %v1680, 3
    %vm1685 = vcmp.lt.s32.totalorder %v1684, 2
    %vm1686 = vcmp.eq.s32.totalorder %v1684, 0
    %v1687 = vxor.u32 %v1682, 2147483648
    %v1688 = vsel %vm1686, %v1681, %v1687
    %vm1689 = vcmp.eq.s32.totalorder %v1684, 2
    %v1690 = vxor.u32 %v1681, 2147483648
    %v1691 = vsel %vm1689, %v1690, %v1682
    %v1692 = vsel %vm1685, %v1688, %v1691
    %v1693 = vsel %vm1683, nan, %v1692
    %v1694 = vpack.c.bf16 %v245, %v141
    %v1695 = vpack.c.bf16 %v453, %v349
    %v1696 = vpack.c.bf16 %v661, %v557
    %v1697 = vpack.c.bf16 %v869, %v765
    %v1698 = vpack.c.bf16 %v1075, %v972
    %v1699 = vpack.c.bf16 %v1281, %v1178
    %v1700 = vpack.c.bf16 %v1487, %v1384
    %v1701 = vpack.c.bf16 %v1693, %v1590
    %v1702 = vld [vmem:[%s1] sm:$0xf]
    %v1703 = vld [vmem:[%s1 + $0x4] sm:$0xf]
    %v1704 = vld [vmem:[%s1 + $0x8] sm:$0xf]
    %v1705 = vld [vmem:[%s1 + $0xc] sm:$0xf]
    %v1706 = vld [vmem:[%s1 + $0x10] sm:$0xf]
    %v1707 = vld [vmem:[%s1 + $0x14] sm:$0xf]
    %v1708 = vld [vmem:[%s1 + $0x18] sm:$0xf]
    %v1709 = vld [vmem:[%s1 + $0x1c] sm:$0xf]
    %v1710 = vld [vmem:[%s2] sm:$0xff]
    %v1711 = vld [vmem:[%s2 + $0x8] sm:$0xff]
    %v1712 = vld [vmem:[%s2 + $0x10] sm:$0xff]
    %v1713 = vld [vmem:[%s2 + $0x18] sm:$0xff]
    %v1714 = vld [vmem:[%s2 + $0x20] sm:$0xff]
    %v1715 = vld [vmem:[%s2 + $0x28] sm:$0xff]
    %v1716 = vld [vmem:[%s2 + $0x30] sm:$0xff]
    %v1717 = vld [vmem:[%s2 + $0x38] sm:$0xff]
    %1719 = vset.pattern.permute.xlu0 0
    %1720 = vperm.xlu0 %1719, %v1710
    %v1721 = vpop.permute.xlu0 %1720
    %1724 = vset.pattern.permute.xlu0 0
    %1725 = vperm.xlu0 %1724, %v1711
    %v1726 = vpop.permute.xlu0 %1725
    %1729 = vset.pattern.permute.xlu0 0
    %1730 = vperm.xlu0 %1729, %v1712
    %v1731 = vpop.permute.xlu0 %1730
    %1734 = vset.pattern.permute.xlu0 0
    %1735 = vperm.xlu0 %1734, %v1713
    %v1736 = vpop.permute.xlu0 %1735
    %1739 = vset.pattern.permute.xlu0 0
    %1740 = vperm.xlu0 %1739, %v1714
    %v1741 = vpop.permute.xlu0 %1740
    %1744 = vset.pattern.permute.xlu0 0
    %1745 = vperm.xlu0 %1744, %v1715
    %v1746 = vpop.permute.xlu0 %1745
    %1749 = vset.pattern.permute.xlu0 0
    %1750 = vperm.xlu0 %1749, %v1716
    %v1751 = vpop.permute.xlu0 %1750
    %1754 = vset.pattern.permute.xlu0 0
    %1755 = vperm.xlu0 %1754, %v1717
    %v1756 = vpop.permute.xlu0 %1755
    %v1766 = vunpack.c.l.b16 %v1702
    %v1767 = vunpack.c.l.b16 %v1703
    %v1768 = vunpack.c.l.b16 %v1704
    %v1769 = vunpack.c.l.b16 %v1705
    %v1770 = vunpack.c.l.b16 %v1706
    %v1771 = vunpack.c.l.b16 %v1707
    %v1772 = vunpack.c.l.b16 %v1708
    %v1773 = vunpack.c.l.b16 %v1709
    %v1774 = vpack.c.b16 %v1767, %v1766
    %v1775 = vpack.c.b16 %v1769, %v1768
    %v1776 = vpack.c.b16 %v1771, %v1770
    %v1777 = vpack.c.b16 %v1773, %v1772
    %1782 = vmatprep.subr.bf16.mxu0 0
    %1783 = vmatpush1.bf16.msra.mxu0 %v1694
    %1784 = vmatprep.subr.bf16.mxu0 0
    %1785 = vmatpush1.bf16.msra.mxu0 %v1695
    %1786 = vmatprep.subr.bf16.mxu0 0
    %1787 = vmatpush1.bf16.msra.mxu0 %v1696
    %1788 = vmatprep.subr.bf16.mxu0 0
    %1789 = vmatpush1.bf16.msra.mxu0 %v1697
    %1790 = vmatprep.subr.bf16.mxu0 0
    %1791 = vmatpush1.bf16.msra.mxu0 %v1698
    %1792 = vmatprep.subr.bf16.mxu0 0
    %1793 = vmatpush1.bf16.msra.mxu0 %v1699
    %1794 = vmatprep.subr.bf16.mxu0 0
    %1795 = vmatpush1.bf16.msra.mxu0 %v1700
    %1796 = vmatprep.subr.bf16.mxu0 0
    %1797 = vmatpush1.bf16.msra.mxu0 %v1701
    %1798 = vmatprep.subr.bf16.mxu0 0
    %1799 = vmatpush1.bf16.msra.mxu0 0
    %1800 = vmatprep.subr.bf16.mxu0 0
    %1801 = vmatpush1.bf16.msra.mxu0 0
    %1802 = vmatprep.subr.bf16.mxu0 0
    %1803 = vmatpush1.bf16.msra.mxu0 0
    %1804 = vmatprep.subr.bf16.mxu0 0
    %1805 = vmatpush1.bf16.msra.mxu0 0
    %1806 = vmatprep.subr.bf16.mxu0 0
    %1807 = vmatpush1.bf16.msra.mxu0 0
    %1808 = vmatprep.subr.bf16.mxu0 0
    %1809 = vmatpush1.bf16.msra.mxu0 0
    %1810 = vmatprep.subr.bf16.mxu0 0
    %1811 = vmatpush1.bf16.msra.mxu0 0
    %1812 = vmatprep.subr.bf16.mxu0 0
    %1813 = vmatpush1.bf16.msra.mxu0 0
    %1814 = vmatprep.mubr.bf16.mxu0 0
    %1815 = vmatmul.mubr.bf16.gmra.mrb[0].mxu0 %v1774
    %v1816 = vpop.f32.mrb[0].mxu0
    %v1817 = vadd.f32 %v1721, %v1816
    %v1818 = vpop.f32.mrb[0].mxu0
    %v1819 = vpop.f32.mrb[0].mxu0
    %v1820 = vadd.f32 %v1726, %v1819
    %v1821 = vpop.f32.mrb[0].mxu0
    %1822 = vmatprep.mubr.bf16.mxu0 0
    %1823 = vmatmul.mubr.bf16.gmra.mrb[0].mxu0 %v1775
    %v1824 = vpop.f32.mrb[0].mxu0
    %v1825 = vadd.f32 %v1731, %v1824
    %v1826 = vpop.f32.mrb[0].mxu0
    %v1827 = vpop.f32.mrb[0].mxu0
    %v1828 = vadd.f32 %v1736, %v1827
    %v1829 = vpop.f32.mrb[0].mxu0
    %1830 = vmatprep.mubr.bf16.mxu0 0
    %1831 = vmatmul.mubr.bf16.gmra.mrb[0].mxu0 %v1776
    %v1832 = vpop.f32.mrb[0].mxu0
    %v1833 = vadd.f32 %v1741, %v1832
    %v1834 = vpop.f32.mrb[0].mxu0
    %v1835 = vpop.f32.mrb[0].mxu0
    %v1836 = vadd.f32 %v1746, %v1835
    %v1837 = vpop.f32.mrb[0].mxu0
    %1838 = vmatprep.mubr.bf16.mxu0 0
    %1839 = vmatmul.mubr.bf16.gmra.mrb[0].mxu0 %v1777
    %v1840 = vpop.f32.mrb[0].mxu0
    %v1841 = vadd.f32 %v1751, %v1840
    %v1842 = vpop.f32.mrb[0].mxu0
    %v1843 = vpop.f32.mrb[0].mxu0
    %v1844 = vadd.f32 %v1756, %v1843
    %v1845 = vpop.f32.mrb[0].mxu0
    %1846 = vdwg.mxu0
    %v1847 = vmax.f32 %v1817, 0.0
    %v1848 = vmax.f32 %v1820, 0.0
    %v1849 = vmax.f32 %v1825, 0.0
    %v1850 = vmax.f32 %v1828, 0.0
    %v1851 = vmax.f32 %v1833, 0.0
    %v1852 = vmax.f32 %v1836, 0.0
    %v1853 = vmax.f32 %v1841, 0.0
    %v1854 = vmax.f32 %v1844, 0.0
    %v1855 = vld [vmem:[%s3] sm:$0xf]
    %v1856 = vld [vmem:[%s3 + $0x4] sm:$0xf]
    %v1857 = vld [vmem:[%s3 + $0x8] sm:$0xf]
    %v1858 = vld [vmem:[%s3 + $0xc] sm:$0xf]
    %v1859 = vld [vmem:[%s3 + $0x10] sm:$0xf]
    %v1860 = vld [vmem:[%s3 + $0x14] sm:$0xf]
    %v1861 = vld [vmem:[%s3 + $0x18] sm:$0xf]
    %v1862 = vld [vmem:[%s3 + $0x1c] sm:$0xf]
    %v1863 = vpack.c.bf16 %v1848, %v1847
    %v1864 = vpack.c.bf16 %v1850, %v1849
    %v1865 = vpack.c.bf16 %v1852, %v1851
    %v1866 = vpack.c.bf16 %v1854, %v1853
    %v1867 = vld [vmem:[%s4] sm:$0xff]
    %v1868 = vld [vmem:[%s4 + $0x8] sm:$0xff]
    %v1869 = vld [vmem:[%s4 + $0x10] sm:$0xff]
    %v1870 = vld [vmem:[%s4 + $0x18] sm:$0xff]
    %v1871 = vld [vmem:[%s4 + $0x20] sm:$0xff]
    %v1872 = vld [vmem:[%s4 + $0x28] sm:$0xff]
    %v1873 = vld [vmem:[%s4 + $0x30] sm:$0xff]
    %v1874 = vld [vmem:[%s4 + $0x38] sm:$0xff]
    %1876 = vset.pattern.permute.xlu0 0
    %1877 = vperm.xlu0 %1876, %v1867
    %v1878 = vpop.permute.xlu0 %1877
    %1881 = vset.pattern.permute.xlu0 0
    %1882 = vperm.xlu0 %1881, %v1868
    %v1883 = vpop.permute.xlu0 %1882
    %1886 = vset.pattern.permute.xlu0 0
    %1887 = vperm.xlu0 %1886, %v1869
    %v1888 = vpop.permute.xlu0 %1887
    %1891 = vset.pattern.permute.xlu0 0
    %1892 = vperm.xlu0 %1891, %v1870
    %v1893 = vpop.permute.xlu0 %1892
    %1896 = vset.pattern.permute.xlu0 0
    %1897 = vperm.xlu0 %1896, %v1871
    %v1898 = vpop.permute.xlu0 %1897
    %1901 = vset.pattern.permute.xlu0 0
    %1902 = vperm.xlu0 %1901, %v1872
    %v1903 = vpop.permute.xlu0 %1902
    %1906 = vset.pattern.permute.xlu0 0
    %1907 = vperm.xlu0 %1906, %v1873
    %v1908 = vpop.permute.xlu0 %1907
    %1911 = vset.pattern.permute.xlu0 0
    %1912 = vperm.xlu0 %1911, %v1874
    %v1913 = vpop.permute.xlu0 %1912
    %v1923 = vunpack.c.l.b16 %v1855
    %v1924 = vunpack.c.l.b16 %v1856
    %v1925 = vunpack.c.l.b16 %v1857
    %v1926 = vunpack.c.l.b16 %v1858
    %v1927 = vunpack.c.l.b16 %v1859
    %v1928 = vunpack.c.l.b16 %v1860
    %v1929 = vunpack.c.l.b16 %v1861
    %v1930 = vunpack.c.l.b16 %v1862
    %v1931 = vpack.c.b16 %v1924, %v1923
    %v1932 = vpack.c.b16 %v1926, %v1925
    %v1933 = vpack.c.b16 %v1928, %v1927
    %v1934 = vpack.c.b16 %v1930, %v1929
    %vm1935 = vcmask 523264
    %v1937 = vsel %vm1935, %v1931, 0
    %v1940 = vsel %vm1935, %v1932, 0
    %v1943 = vsel %vm1935, %v1933, 0
    %v1946 = vsel %vm1935, %v1934, 0
    %1948 = vmatprep.subr.bf16.mxu0 0
    %1949 = vmatpush1.bf16.msra.mxu0 %v1863
    %1950 = vmatprep.subr.bf16.mxu0 0
    %1951 = vmatpush1.bf16.msra.mxu0 %v1864
    %1952 = vmatprep.subr.bf16.mxu0 0
    %1953 = vmatpush1.bf16.msra.mxu0 %v1865
    %1954 = vmatprep.subr.bf16.mxu0 0
    %1955 = vmatpush1.bf16.msra.mxu0 %v1866
    %1956 = vmatprep.subr.bf16.mxu0 0
    %1957 = vmatpush1.bf16.msra.mxu0 0
    %1958 = vmatprep.subr.bf16.mxu0 0
    %1959 = vmatpush1.bf16.msra.mxu0 0
    %1960 = vmatprep.subr.bf16.mxu0 0
    %1961 = vmatpush1.bf16.msra.mxu0 0
    %1962 = vmatprep.subr.bf16.mxu0 0
    %1963 = vmatpush1.bf16.msra.mxu0 0
    %1964 = vmatprep.subr.bf16.mxu0 0
    %1965 = vmatpush1.bf16.msra.mxu0 0
    %1966 = vmatprep.subr.bf16.mxu0 0
    %1967 = vmatpush1.bf16.msra.mxu0 0
    %1968 = vmatprep.subr.bf16.mxu0 0
    %1969 = vmatpush1.bf16.msra.mxu0 0
    %1970 = vmatprep.subr.bf16.mxu0 0
    %1971 = vmatpush1.bf16.msra.mxu0 0
    %1972 = vmatprep.subr.bf16.mxu0 0
    %1973 = vmatpush1.bf16.msra.mxu0 0
    %1974 = vmatprep.subr.bf16.mxu0 0
    %1975 = vmatpush1.bf16.msra.mxu0 0
    %1976 = vmatprep.subr.bf16.mxu0 0
    %1977 = vmatpush1.bf16.msra.mxu0 0
    %1978 = vmatprep.subr.bf16.mxu0 0
    %1979 = vmatpush1.bf16.msra.mxu0 0
    %1980 = vmatprep.mubr.bf16.mxu0 0
    %1981 = vmatmul.mubr.bf16.gmra.mrb[0].mxu0 %v1937
    %v1982 = vpop.f32.mrb[0].mxu0
    %v1983 = vadd.f32 %v1878, %v1982
    %v1984 = vpop.f32.mrb[0].mxu0
    %v1985 = vpop.f32.mrb[0].mxu0
    %v1986 = vadd.f32 %v1883, %v1985
    %v1987 = vpop.f32.mrb[0].mxu0
    %1988 = vmatprep.mubr.bf16.mxu0 0
    %1989 = vmatmul.mubr.bf16.gmra.mrb[0].mxu0 %v1940
    %v1990 = vpop.f32.mrb[0].mxu0
    %v1991 = vadd.f32 %v1888, %v1990
    %v1992 = vpop.f32.mrb[0].mxu0
    %v1993 = vpop.f32.mrb[0].mxu0
    %v1994 = vadd.f32 %v1893, %v1993
    %v1995 = vpop.f32.mrb[0].mxu0
    %1996 = vmatprep.mubr.bf16.mxu0 0
    %1997 = vmatmul.mubr.bf16.gmra.mrb[0].mxu0 %v1943
    %v1998 = vpop.f32.mrb[0].mxu0
    %v1999 = vadd.f32 %v1898, %v1998
    %v2000 = vpop.f32.mrb[0].mxu0
    %v2001 = vpop.f32.mrb[0].mxu0
    %v2002 = vadd.f32 %v1903, %v2001
    %v2003 = vpop.f32.mrb[0].mxu0
    %2004 = vmatprep.mubr.bf16.mxu0 0
    %2005 = vmatmul.mubr.bf16.gmra.mrb[0].mxu0 %v1946
    %v2006 = vpop.f32.mrb[0].mxu0
    %v2007 = vadd.f32 %v1908, %v2006
    %v2008 = vpop.f32.mrb[0].mxu0
    %v2009 = vpop.f32.mrb[0].mxu0
    %v2010 = vadd.f32 %v1913, %v2009
    %v2011 = vpop.f32.mrb[0].mxu0
    %2012 = vdwg.mxu0
    %v2013 = vmax.f32 %v1983, 0.0
    %v2014 = vmax.f32 %v1986, 0.0
    %v2015 = vmax.f32 %v1991, 0.0
    %v2016 = vmax.f32 %v1994, 0.0
    %v2017 = vmax.f32 %v1999, 0.0
    %v2018 = vmax.f32 %v2002, 0.0
    %v2019 = vmax.f32 %v2007, 0.0
    %v2020 = vmax.f32 %v2010, 0.0
    %v2021 = vld [vmem:[%s5] sm:$0x1]
    %v2022 = vpack.c.bf16 %v2014, %v2013
    %v2023 = vpack.c.bf16 %v2016, %v2015
    %v2024 = vpack.c.bf16 %v2018, %v2017
    %v2025 = vpack.c.bf16 %v2020, %v2019
    %v2026 = vld [vmem:[%s6] sm:$0x3]
    %2028 = vset.pattern.permute.xlu0 0
    %2029 = vperm.xlu0 %2028, %v2026
    %v2030 = vpop.permute.xlu0 %2029
    %v2033 = vsel %vm1935, %v2021, 0
    %2035 = vmatprep.subr.bf16.mxu0 0
    %2036 = vmatpush1.bf16.msra.mxu0 %v2022
    %2037 = vmatprep.subr.bf16.mxu0 0
    %2038 = vmatpush1.bf16.msra.mxu0 %v2023
    %2039 = vmatprep.subr.bf16.mxu0 0
    %2040 = vmatpush1.bf16.msra.mxu0 %v2024
    %2041 = vmatprep.subr.bf16.mxu0 0
    %2042 = vmatpush1.bf16.msra.mxu0 %v2025
    %2043 = vmatprep.subr.bf16.mxu0 0
    %2044 = vmatpush1.bf16.msra.mxu0 0
    %2045 = vmatprep.subr.bf16.mxu0 0
    %2046 = vmatpush1.bf16.msra.mxu0 0
    %2047 = vmatprep.subr.bf16.mxu0 0
    %2048 = vmatpush1.bf16.msra.mxu0 0
    %2049 = vmatprep.subr.bf16.mxu0 0
    %2050 = vmatpush1.bf16.msra.mxu0 0
    %2051 = vmatprep.subr.bf16.mxu0 0
    %2052 = vmatpush1.bf16.msra.mxu0 0
    %2053 = vmatprep.subr.bf16.mxu0 0
    %2054 = vmatpush1.bf16.msra.mxu0 0
    %2055 = vmatprep.subr.bf16.mxu0 0
    %2056 = vmatpush1.bf16.msra.mxu0 0
    %2057 = vmatprep.subr.bf16.mxu0 0
    %2058 = vmatpush1.bf16.msra.mxu0 0
    %2059 = vmatprep.subr.bf16.mxu0 0
    %2060 = vmatpush1.bf16.msra.mxu0 0
    %2061 = vmatprep.subr.bf16.mxu0 0
    %2062 = vmatpush1.bf16.msra.mxu0 0
    %2063 = vmatprep.subr.bf16.mxu0 0
    %2064 = vmatpush1.bf16.msra.mxu0 0
    %2065 = vmatprep.subr.bf16.mxu0 0
    %2066 = vmatpush1.bf16.msra.mxu0 0
    %2067 = vmatprep.mubr.bf16.mxu0 0
    %2068 = vmatmul.mubr.bf16.gmra.mrb[0].mxu0 %v2033
    %v2069 = vpop.f32.mrb[0].mxu0
    %v2070 = vadd.f32 %v2030, %v2069
    %v2071 = vpop.f32.mrb[0].mxu0
    %v2072 = vpop.f32.mrb[0].mxu0
    %v2073 = vpop.f32.mrb[0].mxu0
    %2074 = vdwg.mxu0
    %2075 = vst [vmem:[#allocation2] sm:$0x3] %v2070
    // Predicated region
    $region30: #{tpu_custom_call.1} parent=1 // pred_check
      _
    $region31: #{tpu_custom_call.1} parent=1 // pred_check_branch
      %2077 = sbr.rel (0) target = $region33
    $region32: #{tpu_custom_call.1} parent=1 // pred_region
      %s2079 = ssub.s32 32, 32
      %2080 = vsyncadd [#allocation3], %s2079
      %s2082 = sshll.u32 [#allocation2], 4
      %s2083 = int_to_ptr.vmem [resolvable:$true] %s2082
      %2085 = dma.vmem_to_hbm [thread:$0]  %s2083, 32, %s7, [#allocation3]
    $region33: #{tpu_custom_call.1} parent=1 // pred_fallthru
      _
    // Predicated region
    $region34: #{tpu_custom_call.1} parent=1 // pred_check
      _
    $region35: #{tpu_custom_call.1} parent=1 // pred_check_branch
      %2087 = sbr.rel (0) target = $region37
    $region36: #{tpu_custom_call.1} parent=1 // pred_region
      %2088 = dma.done [#allocation3], 32
    $region37: #{tpu_custom_call.1} parent=1 // pred_fallthru
      _
    %2089 = vsyncpa [#allocation3], 1

</llo_original>
